<compile_context>
chip_gen: v6e
topology: v6e:2x2x1
jax: 0.10.0
libtpu: 0.0.40
codegen_flags: <defaults>
</compile_context>

<pallas_src>
import jax
import jax.numpy as jnp
from jax import lax
from jax.experimental import pallas as pl
from jax.experimental.pallas import tpu as pltpu

EPS = 1e-5
LANE = 128


def _round_up(x, m):
    return (x + m - 1) // m * m


# ---------------------------------------------------------------------------
# kernel
# ---------------------------------------------------------------------------
def resnet_kernel(
    x_ref,        # (N, DP)   padded input
    sig_ref,      # (N, 1)    sigma[y] per row
    w_in_ref,     # (DP, HP)
    blk_w1_ref,   # (nb, HP, HP)
    blk_w2_ref,   # (nb, HP, HP)
    w_out_ref,    # (HP, DP)
    b_out_ref,    # (1, DP)
    bn_ref,       # (2*beta_off, HP): rows [0..n_bn) gammas, [beta_off..) betas
    o_ref,        # (N, DP)
):
    x = x_ref[...]
    bn = bn_ref[...]
    beta_off = bn.shape[0] // 2
    inv_n = 1.0 / x.shape[0]          # static batch size -> compile-time const

    def bn_layer(h, layer, relu):
        gamma = bn[layer : layer + 1, :]
        beta = bn[beta_off + layer : beta_off + layer + 1, :]
        # single-pass stats: mean and E[x^2] over the full batch
        s1 = jnp.sum(h, axis=0, keepdims=True)
        s2 = jnp.sum(h * h, axis=0, keepdims=True)
        mean = s1 * inv_n
        var = s2 * inv_n - mean * mean
        scale = gamma * lax.rsqrt(var + EPS)
        shift = beta - mean * scale
        out = h * scale + shift
        if relu:
            out = jnp.maximum(out, 0.0)
        return out

    # fc_in (bias dropped: cancels with BN mean subtraction) + bn + relu
    h = jnp.dot(x, w_in_ref[...], preferred_element_type=jnp.float32)
    h = bn_layer(h, 0, relu=True)

    # residual blocks (static Python loop; num_blocks small and fixed)
    num_blocks = blk_w1_ref.shape[0]
    for i in range(num_blocks):
        r = jnp.dot(h, blk_w1_ref[i], preferred_element_type=jnp.float32)
        r = bn_layer(r, 2 * i + 1, relu=True)
        r = jnp.dot(r, blk_w2_ref[i], preferred_element_type=jnp.float32)
        r = bn_layer(r, 2 * i + 2, relu=False)
        h = h + r

    # fc_out (+ real bias) then per-row sigma division as reciprocal + multiply
    out = jnp.dot(h, w_out_ref[...], preferred_element_type=jnp.float32)
    out = out + b_out_ref[...]
    inv_sig = 1.0 / sig_ref[...]               # (N, 1) column, cheap
    o_ref[...] = out * inv_sig


# ---------------------------------------------------------------------------
# wrapper: pad / pack params once, call the kernel, slice the output
# ---------------------------------------------------------------------------
def prepare_kernel_params(params, data_dim, hidden_dim):
    HP = _round_up(hidden_dim, LANE)
    DP = _round_up(data_dim, LANE)
    nb = params["blk_w1"].shape[0]

    def pad_to(a, shape):
        return jnp.pad(a, [(0, s - d) for d, s in zip(a.shape, shape)])

    w_in = pad_to(params["w_in"], (DP, HP))
    blk_w1 = pad_to(params["blk_w1"], (nb, HP, HP))
    blk_w2 = pad_to(params["blk_w2"], (nb, HP, HP))
    w_out = pad_to(params["w_out"], (HP, DP))
    b_out = pad_to(params["b_out"], (1, DP))

    # pack all BN gammas / betas into one array (padded lanes get gamma=0,
    # beta=0 so padded feature columns stay exactly zero through the network).
    n_bn = 1 + 2 * nb
    beta_off = _round_up(n_bn, 8)
    bn_pack = jnp.zeros((2 * beta_off, HP), jnp.float32)
    gammas = [params["g_in"]] + [
        g for i in range(nb) for g in (params["blk_g1"][i], params["blk_g2"][i])
    ]
    betas = [params["be_in"]] + [
        b for i in range(nb) for b in (params["blk_be1"][i], params["blk_be2"][i])
    ]
    for j, (g, b) in enumerate(zip(gammas, betas)):
        bn_pack = bn_pack.at[j, :hidden_dim].set(g.reshape(-1))
        bn_pack = bn_pack.at[beta_off + j, :hidden_dim].set(b.reshape(-1))

    return {
        "w_in": w_in, "blk_w1": blk_w1, "blk_w2": blk_w2,
        "w_out": w_out, "b_out": b_out, "bn_pack": bn_pack,
        "DP": DP, "HP": HP,
    }


def simple_resnet_forward(x, used_sigmas, kparams, data_dim):
    """x: (N, data_dim) f32, used_sigmas: (N, 1) f32 (= sigmas[y])."""
    N = x.shape[0]
    DP = kparams["DP"]
    x_pad = jnp.pad(x, ((0, 0), (0, DP - data_dim)))

    inputs = (
        x_pad, used_sigmas,
        kparams["w_in"], kparams["blk_w1"], kparams["blk_w2"],
        kparams["w_out"], kparams["b_out"], kparams["bn_pack"],
    )
    vmem = pl.BlockSpec(memory_space=pltpu.MemorySpace.VMEM)
    out_pad = pl.pallas_call(
        resnet_kernel,
        out_shape=jax.ShapeDtypeStruct((N, DP), jnp.float32),
        in_specs=[vmem] * len(inputs),
        out_specs=vmem,
    )(*inputs)
    return out_pad[:, :data_dim]


# ---------------------------------------------------------------------------
# logical (un-padded) params + pure-JAX reference mirroring PyTorch forward
# ---------------------------------------------------------------------------
def init_params(key, data_dim, hidden_dim, num_blocks):
    ks = jax.random.split(key, 16)
    f32 = jnp.float32
    return {
        # linear weights stored pre-transposed as (in, out)
        "w_in": jax.random.normal(ks[0], (data_dim, hidden_dim), f32) * 0.1,
        "b_in": jax.random.normal(ks[1], (1, hidden_dim), f32) * 0.01,
        "g_in": 1.0 + 0.1 * jax.random.normal(ks[2], (1, hidden_dim), f32),
        "be_in": 0.1 * jax.random.normal(ks[3], (1, hidden_dim), f32),
        "blk_w1": jax.random.normal(ks[4], (num_blocks, hidden_dim, hidden_dim), f32) * 0.1,
        "blk_b1": jax.random.normal(ks[5], (num_blocks, 1, hidden_dim), f32) * 0.01,
        "blk_g1": 1.0 + 0.1 * jax.random.normal(ks[6], (num_blocks, 1, hidden_dim), f32),
        "blk_be1": 0.1 * jax.random.normal(ks[7], (num_blocks, 1, hidden_dim), f32),
        "blk_w2": jax.random.normal(ks[8], (num_blocks, hidden_dim, hidden_dim), f32) * 0.1,
        "blk_b2": jax.random.normal(ks[9], (num_blocks, 1, hidden_dim), f32) * 0.01,
        "blk_g2": 1.0 + 0.1 * jax.random.normal(ks[10], (num_blocks, 1, hidden_dim), f32),
        "blk_be2": 0.1 * jax.random.normal(ks[11], (num_blocks, 1, hidden_dim), f32),
        "w_out": jax.random.normal(ks[12], (hidden_dim, data_dim), f32) * 0.1,
        "b_out": jax.random.normal(ks[13], (1, data_dim), f32) * 0.01,
    }


def reference_forward(x, used_sigmas, params):
    """Pure-JAX reference of the PyTorch forward (training-mode BN, biases kept)."""
    def bn(h, g, b):
        mean = jnp.mean(h, axis=0, keepdims=True)
        var = jnp.mean((h - mean) ** 2, axis=0, keepdims=True)
        return (h - mean) * lax.rsqrt(var + EPS) * g + b

    h = x @ params["w_in"] + params["b_in"]
    h = jnp.maximum(bn(h, params["g_in"], params["be_in"]), 0.0)
    for i in range(params["blk_w1"].shape[0]):
        r = h @ params["blk_w1"][i] + params["blk_b1"][i]
        r = jnp.maximum(bn(r, params["blk_g1"][i], params["blk_be1"][i]), 0.0)
        r = r @ params["blk_w2"][i] + params["blk_b2"][i]
        r = bn(r, params["blk_g2"][i], params["blk_be2"][i])
        h = h + r
    out = h @ params["w_out"] + params["b_out"]
    return out / used_sigmas


if __name__ == "__main__":
    data_dim, hidden_dim, num_blocks = 16, 32, 3
    n_sigmas, batch = 10, 64

    key = jax.random.PRNGKey(0)
    k_x, k_y, k_p = jax.random.split(key, 3)

    x = jax.random.normal(k_x, (batch, data_dim), jnp.float32)
    y = jax.random.randint(k_y, (batch,), 0, n_sigmas)
    sigmas = jnp.exp(jnp.linspace(jnp.log(1.0), jnp.log(0.01), n_sigmas)).astype(jnp.float32)

    params = init_params(k_p, data_dim, hidden_dim, num_blocks)
    kparams = prepare_kernel_params(params, data_dim, hidden_dim)

    # glue: sigma gather + reshape to (N, 1) done in plain JAX
    used_sigmas = sigmas[y].reshape(batch, 1)

    out = simple_resnet_forward(x, used_sigmas, kparams, data_dim)
    out = jax.block_until_ready(out)

    ref = reference_forward(x, used_sigmas, params)
    assert out.shape == (batch, data_dim)
    assert jnp.allclose(out, ref, atol=1e-4, rtol=1e-4), "mismatch vs JAX reference"

    print("KERNEL_OK")
</pallas_src>

<mosaic_0001>
module attributes {stable_mosaic.version = 11 : i64} {
  func.func @resnet_kernel(%arg0: memref<64x128xf32, #tpu.memory_space<vmem>>, %arg1: memref<64x1xf32, #tpu.memory_space<vmem>>, %arg2: memref<128x128xf32, #tpu.memory_space<vmem>>, %arg3: memref<3x128x128xf32, #tpu.memory_space<vmem>>, %arg4: memref<3x128x128xf32, #tpu.memory_space<vmem>>, %arg5: memref<128x128xf32, #tpu.memory_space<vmem>>, %arg6: memref<1x128xf32, #tpu.memory_space<vmem>>, %arg7: memref<16x128xf32, #tpu.memory_space<vmem>>, %arg8: memref<64x128xf32, #tpu.memory_space<vmem>>) attributes {dimension_semantics = [], scalar_prefetch = 0 : i64, scratch_operands = 0 : i64, tpu.core_type = #tpu.core_type<tc>} {
    %c0 = arith.constant 0 : index
    %c0_0 = arith.constant 0 : index
    %0 = vector.load %arg0[%c0, %c0_0] : memref<64x128xf32, #tpu.memory_space<vmem>>, vector<64x128xf32>
    %c0_1 = arith.constant 0 : index
    %c0_2 = arith.constant 0 : index
    %1 = vector.load %arg7[%c0_1, %c0_2] : memref<16x128xf32, #tpu.memory_space<vmem>>, vector<16x128xf32>
    %c0_3 = arith.constant 0 : index
    %c0_4 = arith.constant 0 : index
    %2 = vector.load %arg2[%c0_3, %c0_4] : memref<128x128xf32, #tpu.memory_space<vmem>>, vector<128x128xf32>
    %cst = arith.constant dense<0.000000e+00> : vector<64x128xf32>
    %3 = tpu.matmul %0, %2, %cst {dimension_numbers = #tpu.dot_dimension_numbers<[1], [0], [0], [1], [0, 0, 1, 1], [], []>} : vector<64x128xf32>, vector<128x128xf32>, vector<64x128xf32> -> vector<64x128xf32>
    %4 = vector.extract_strided_slice %1 {offsets = [0, 0], sizes = [1, 128], strides = [1, 1]} : vector<16x128xf32> to vector<1x128xf32>
    %5 = vector.extract_strided_slice %1 {offsets = [8, 0], sizes = [1, 128], strides = [1, 1]} : vector<16x128xf32> to vector<1x128xf32>
    %cst_5 = arith.constant dense<0.000000e+00> : vector<128xf32>
    %6 = vector.multi_reduction <add>, %3, %cst_5 [0] : vector<64x128xf32> to vector<128xf32>
    %7 = vector.shape_cast %6 : vector<128xf32> to vector<1x128xf32>
    %8 = arith.mulf %3, %3 : vector<64x128xf32>
    %cst_6 = arith.constant dense<0.000000e+00> : vector<128xf32>
    %9 = vector.multi_reduction <add>, %8, %cst_6 [0] : vector<64x128xf32> to vector<128xf32>
    %10 = vector.shape_cast %9 : vector<128xf32> to vector<1x128xf32>
    %cst_7 = arith.constant 1.562500e-02 : f32
    %11 = vector.broadcast %cst_7 : f32 to vector<1x128xf32>
    %12 = arith.mulf %7, %11 : vector<1x128xf32>
    %cst_8 = arith.constant 1.562500e-02 : f32
    %13 = vector.broadcast %cst_8 : f32 to vector<1x128xf32>
    %14 = arith.mulf %10, %13 : vector<1x128xf32>
    %15 = arith.mulf %12, %12 : vector<1x128xf32>
    %16 = arith.subf %14, %15 : vector<1x128xf32>
    %cst_9 = arith.constant 9.99999974E-6 : f32
    %17 = vector.broadcast %cst_9 : f32 to vector<1x128xf32>
    %18 = arith.addf %16, %17 : vector<1x128xf32>
    %19 = math.rsqrt %18 : vector<1x128xf32>
    %20 = arith.mulf %4, %19 : vector<1x128xf32>
    %21 = arith.mulf %12, %20 : vector<1x128xf32>
    %22 = arith.subf %5, %21 : vector<1x128xf32>
    %23 = vector.broadcast %20 : vector<1x128xf32> to vector<64x128xf32>
    %24 = arith.mulf %3, %23 : vector<64x128xf32>
    %25 = vector.broadcast %22 : vector<1x128xf32> to vector<64x128xf32>
    %26 = arith.addf %24, %25 : vector<64x128xf32>
    %cst_10 = arith.constant 0.000000e+00 : f32
    %27 = vector.broadcast %cst_10 : f32 to vector<64x128xf32>
    %28 = arith.maximumf %26, %27 : vector<64x128xf32>
    %c0_11 = arith.constant 0 : index
    %c0_12 = arith.constant 0 : index
    %c0_13 = arith.constant 0 : index
    %29 = vector.load %arg3[%c0_11, %c0_12, %c0_13] : memref<3x128x128xf32, #tpu.memory_space<vmem>>, vector<1x128x128xf32>
    %30 = vector.shape_cast %29 : vector<1x128x128xf32> to vector<128x128xf32>
    %cst_14 = arith.constant dense<0.000000e+00> : vector<64x128xf32>
    %31 = tpu.matmul %28, %30, %cst_14 {dimension_numbers = #tpu.dot_dimension_numbers<[1], [0], [0], [1], [0, 0, 1, 1], [], []>} : vector<64x128xf32>, vector<128x128xf32>, vector<64x128xf32> -> vector<64x128xf32>
    %32 = vector.extract_strided_slice %1 {offsets = [1, 0], sizes = [1, 128], strides = [1, 1]} : vector<16x128xf32> to vector<1x128xf32>
    %33 = vector.extract_strided_slice %1 {offsets = [9, 0], sizes = [1, 128], strides = [1, 1]} : vector<16x128xf32> to vector<1x128xf32>
    %cst_15 = arith.constant dense<0.000000e+00> : vector<128xf32>
    %34 = vector.multi_reduction <add>, %31, %cst_15 [0] : vector<64x128xf32> to vector<128xf32>
    %35 = vector.shape_cast %34 : vector<128xf32> to vector<1x128xf32>
    %36 = arith.mulf %31, %31 : vector<64x128xf32>
    %cst_16 = arith.constant dense<0.000000e+00> : vector<128xf32>
    %37 = vector.multi_reduction <add>, %36, %cst_16 [0] : vector<64x128xf32> to vector<128xf32>
    %38 = vector.shape_cast %37 : vector<128xf32> to vector<1x128xf32>
    %cst_17 = arith.constant 1.562500e-02 : f32
    %39 = vector.broadcast %cst_17 : f32 to vector<1x128xf32>
    %40 = arith.mulf %35, %39 : vector<1x128xf32>
    %cst_18 = arith.constant 1.562500e-02 : f32
    %41 = vector.broadcast %cst_18 : f32 to vector<1x128xf32>
    %42 = arith.mulf %38, %41 : vector<1x128xf32>
    %43 = arith.mulf %40, %40 : vector<1x128xf32>
    %44 = arith.subf %42, %43 : vector<1x128xf32>
    %cst_19 = arith.constant 9.99999974E-6 : f32
    %45 = vector.broadcast %cst_19 : f32 to vector<1x128xf32>
    %46 = arith.addf %44, %45 : vector<1x128xf32>
    %47 = math.rsqrt %46 : vector<1x128xf32>
    %48 = arith.mulf %32, %47 : vector<1x128xf32>
    %49 = arith.mulf %40, %48 : vector<1x128xf32>
    %50 = arith.subf %33, %49 : vector<1x128xf32>
    %51 = vector.broadcast %48 : vector<1x128xf32> to vector<64x128xf32>
    %52 = arith.mulf %31, %51 : vector<64x128xf32>
    %53 = vector.broadcast %50 : vector<1x128xf32> to vector<64x128xf32>
    %54 = arith.addf %52, %53 : vector<64x128xf32>
    %cst_20 = arith.constant 0.000000e+00 : f32
    %55 = vector.broadcast %cst_20 : f32 to vector<64x128xf32>
    %56 = arith.maximumf %54, %55 : vector<64x128xf32>
    %c0_21 = arith.constant 0 : index
    %c0_22 = arith.constant 0 : index
    %c0_23 = arith.constant 0 : index
    %57 = vector.load %arg4[%c0_21, %c0_22, %c0_23] : memref<3x128x128xf32, #tpu.memory_space<vmem>>, vector<1x128x128xf32>
    %58 = vector.shape_cast %57 : vector<1x128x128xf32> to vector<128x128xf32>
    %cst_24 = arith.constant dense<0.000000e+00> : vector<64x128xf32>
    %59 = tpu.matmul %56, %58, %cst_24 {dimension_numbers = #tpu.dot_dimension_numbers<[1], [0], [0], [1], [0, 0, 1, 1], [], []>} : vector<64x128xf32>, vector<128x128xf32>, vector<64x128xf32> -> vector<64x128xf32>
    %60 = vector.extract_strided_slice %1 {offsets = [2, 0], sizes = [1, 128], strides = [1, 1]} : vector<16x128xf32> to vector<1x128xf32>
    %61 = vector.extract_strided_slice %1 {offsets = [10, 0], sizes = [1, 128], strides = [1, 1]} : vector<16x128xf32> to vector<1x128xf32>
    %cst_25 = arith.constant dense<0.000000e+00> : vector<128xf32>
    %62 = vector.multi_reduction <add>, %59, %cst_25 [0] : vector<64x128xf32> to vector<128xf32>
    %63 = vector.shape_cast %62 : vector<128xf32> to vector<1x128xf32>
    %64 = arith.mulf %59, %59 : vector<64x128xf32>
    %cst_26 = arith.constant dense<0.000000e+00> : vector<128xf32>
    %65 = vector.multi_reduction <add>, %64, %cst_26 [0] : vector<64x128xf32> to vector<128xf32>
    %66 = vector.shape_cast %65 : vector<128xf32> to vector<1x128xf32>
    %cst_27 = arith.constant 1.562500e-02 : f32
    %67 = vector.broadcast %cst_27 : f32 to vector<1x128xf32>
    %68 = arith.mulf %63, %67 : vector<1x128xf32>
    %cst_28 = arith.constant 1.562500e-02 : f32
    %69 = vector.broadcast %cst_28 : f32 to vector<1x128xf32>
    %70 = arith.mulf %66, %69 : vector<1x128xf32>
    %71 = arith.mulf %68, %68 : vector<1x128xf32>
    %72 = arith.subf %70, %71 : vector<1x128xf32>
    %cst_29 = arith.constant 9.99999974E-6 : f32
    %73 = vector.broadcast %cst_29 : f32 to vector<1x128xf32>
    %74 = arith.addf %72, %73 : vector<1x128xf32>
    %75 = math.rsqrt %74 : vector<1x128xf32>
    %76 = arith.mulf %60, %75 : vector<1x128xf32>
    %77 = arith.mulf %68, %76 : vector<1x128xf32>
    %78 = arith.subf %61, %77 : vector<1x128xf32>
    %79 = vector.broadcast %76 : vector<1x128xf32> to vector<64x128xf32>
    %80 = arith.mulf %59, %79 : vector<64x128xf32>
    %81 = vector.broadcast %78 : vector<1x128xf32> to vector<64x128xf32>
    %82 = arith.addf %80, %81 : vector<64x128xf32>
    %83 = arith.addf %28, %82 : vector<64x128xf32>
    %c1 = arith.constant 1 : index
    %c0_30 = arith.constant 0 : index
    %c0_31 = arith.constant 0 : index
    %84 = vector.load %arg3[%c1, %c0_30, %c0_31] : memref<3x128x128xf32, #tpu.memory_space<vmem>>, vector<1x128x128xf32>
    %85 = vector.shape_cast %84 : vector<1x128x128xf32> to vector<128x128xf32>
    %cst_32 = arith.constant dense<0.000000e+00> : vector<64x128xf32>
    %86 = tpu.matmul %83, %85, %cst_32 {dimension_numbers = #tpu.dot_dimension_numbers<[1], [0], [0], [1], [0, 0, 1, 1], [], []>} : vector<64x128xf32>, vector<128x128xf32>, vector<64x128xf32> -> vector<64x128xf32>
    %87 = vector.extract_strided_slice %1 {offsets = [3, 0], sizes = [1, 128], strides = [1, 1]} : vector<16x128xf32> to vector<1x128xf32>
    %88 = vector.extract_strided_slice %1 {offsets = [11, 0], sizes = [1, 128], strides = [1, 1]} : vector<16x128xf32> to vector<1x128xf32>
    %cst_33 = arith.constant dense<0.000000e+00> : vector<128xf32>
    %89 = vector.multi_reduction <add>, %86, %cst_33 [0] : vector<64x128xf32> to vector<128xf32>
    %90 = vector.shape_cast %89 : vector<128xf32> to vector<1x128xf32>
    %91 = arith.mulf %86, %86 : vector<64x128xf32>
    %cst_34 = arith.constant dense<0.000000e+00> : vector<128xf32>
    %92 = vector.multi_reduction <add>, %91, %cst_34 [0] : vector<64x128xf32> to vector<128xf32>
    %93 = vector.shape_cast %92 : vector<128xf32> to vector<1x128xf32>
    %cst_35 = arith.constant 1.562500e-02 : f32
    %94 = vector.broadcast %cst_35 : f32 to vector<1x128xf32>
    %95 = arith.mulf %90, %94 : vector<1x128xf32>
    %cst_36 = arith.constant 1.562500e-02 : f32
    %96 = vector.broadcast %cst_36 : f32 to vector<1x128xf32>
    %97 = arith.mulf %93, %96 : vector<1x128xf32>
    %98 = arith.mulf %95, %95 : vector<1x128xf32>
    %99 = arith.subf %97, %98 : vector<1x128xf32>
    %cst_37 = arith.constant 9.99999974E-6 : f32
    %100 = vector.broadcast %cst_37 : f32 to vector<1x128xf32>
    %101 = arith.addf %99, %100 : vector<1x128xf32>
    %102 = math.rsqrt %101 : vector<1x128xf32>
    %103 = arith.mulf %87, %102 : vector<1x128xf32>
    %104 = arith.mulf %95, %103 : vector<1x128xf32>
    %105 = arith.subf %88, %104 : vector<1x128xf32>
    %106 = vector.broadcast %103 : vector<1x128xf32> to vector<64x128xf32>
    %107 = arith.mulf %86, %106 : vector<64x128xf32>
    %108 = vector.broadcast %105 : vector<1x128xf32> to vector<64x128xf32>
    %109 = arith.addf %107, %108 : vector<64x128xf32>
    %cst_38 = arith.constant 0.000000e+00 : f32
    %110 = vector.broadcast %cst_38 : f32 to vector<64x128xf32>
    %111 = arith.maximumf %109, %110 : vector<64x128xf32>
    %c1_39 = arith.constant 1 : index
    %c0_40 = arith.constant 0 : index
    %c0_41 = arith.constant 0 : index
    %112 = vector.load %arg4[%c1_39, %c0_40, %c0_41] : memref<3x128x128xf32, #tpu.memory_space<vmem>>, vector<1x128x128xf32>
    %113 = vector.shape_cast %112 : vector<1x128x128xf32> to vector<128x128xf32>
    %cst_42 = arith.constant dense<0.000000e+00> : vector<64x128xf32>
    %114 = tpu.matmul %111, %113, %cst_42 {dimension_numbers = #tpu.dot_dimension_numbers<[1], [0], [0], [1], [0, 0, 1, 1], [], []>} : vector<64x128xf32>, vector<128x128xf32>, vector<64x128xf32> -> vector<64x128xf32>
    %115 = vector.extract_strided_slice %1 {offsets = [4, 0], sizes = [1, 128], strides = [1, 1]} : vector<16x128xf32> to vector<1x128xf32>
    %116 = vector.extract_strided_slice %1 {offsets = [12, 0], sizes = [1, 128], strides = [1, 1]} : vector<16x128xf32> to vector<1x128xf32>
    %cst_43 = arith.constant dense<0.000000e+00> : vector<128xf32>
    %117 = vector.multi_reduction <add>, %114, %cst_43 [0] : vector<64x128xf32> to vector<128xf32>
    %118 = vector.shape_cast %117 : vector<128xf32> to vector<1x128xf32>
    %119 = arith.mulf %114, %114 : vector<64x128xf32>
    %cst_44 = arith.constant dense<0.000000e+00> : vector<128xf32>
    %120 = vector.multi_reduction <add>, %119, %cst_44 [0] : vector<64x128xf32> to vector<128xf32>
    %121 = vector.shape_cast %120 : vector<128xf32> to vector<1x128xf32>
    %cst_45 = arith.constant 1.562500e-02 : f32
    %122 = vector.broadcast %cst_45 : f32 to vector<1x128xf32>
    %123 = arith.mulf %118, %122 : vector<1x128xf32>
    %cst_46 = arith.constant 1.562500e-02 : f32
    %124 = vector.broadcast %cst_46 : f32 to vector<1x128xf32>
    %125 = arith.mulf %121, %124 : vector<1x128xf32>
    %126 = arith.mulf %123, %123 : vector<1x128xf32>
    %127 = arith.subf %125, %126 : vector<1x128xf32>
    %cst_47 = arith.constant 9.99999974E-6 : f32
    %128 = vector.broadcast %cst_47 : f32 to vector<1x128xf32>
    %129 = arith.addf %127, %128 : vector<1x128xf32>
    %130 = math.rsqrt %129 : vector<1x128xf32>
    %131 = arith.mulf %115, %130 : vector<1x128xf32>
    %132 = arith.mulf %123, %131 : vector<1x128xf32>
    %133 = arith.subf %116, %132 : vector<1x128xf32>
    %134 = vector.broadcast %131 : vector<1x128xf32> to vector<64x128xf32>
    %135 = arith.mulf %114, %134 : vector<64x128xf32>
    %136 = vector.broadcast %133 : vector<1x128xf32> to vector<64x128xf32>
    %137 = arith.addf %135, %136 : vector<64x128xf32>
    %138 = arith.addf %83, %137 : vector<64x128xf32>
    %c2 = arith.constant 2 : index
    %c0_48 = arith.constant 0 : index
    %c0_49 = arith.constant 0 : index
    %139 = vector.load %arg3[%c2, %c0_48, %c0_49] : memref<3x128x128xf32, #tpu.memory_space<vmem>>, vector<1x128x128xf32>
    %140 = vector.shape_cast %139 : vector<1x128x128xf32> to vector<128x128xf32>
    %cst_50 = arith.constant dense<0.000000e+00> : vector<64x128xf32>
    %141 = tpu.matmul %138, %140, %cst_50 {dimension_numbers = #tpu.dot_dimension_numbers<[1], [0], [0], [1], [0, 0, 1, 1], [], []>} : vector<64x128xf32>, vector<128x128xf32>, vector<64x128xf32> -> vector<64x128xf32>
    %142 = vector.extract_strided_slice %1 {offsets = [5, 0], sizes = [1, 128], strides = [1, 1]} : vector<16x128xf32> to vector<1x128xf32>
    %143 = vector.extract_strided_slice %1 {offsets = [13, 0], sizes = [1, 128], strides = [1, 1]} : vector<16x128xf32> to vector<1x128xf32>
    %cst_51 = arith.constant dense<0.000000e+00> : vector<128xf32>
    %144 = vector.multi_reduction <add>, %141, %cst_51 [0] : vector<64x128xf32> to vector<128xf32>
    %145 = vector.shape_cast %144 : vector<128xf32> to vector<1x128xf32>
    %146 = arith.mulf %141, %141 : vector<64x128xf32>
    %cst_52 = arith.constant dense<0.000000e+00> : vector<128xf32>
    %147 = vector.multi_reduction <add>, %146, %cst_52 [0] : vector<64x128xf32> to vector<128xf32>
    %148 = vector.shape_cast %147 : vector<128xf32> to vector<1x128xf32>
    %cst_53 = arith.constant 1.562500e-02 : f32
    %149 = vector.broadcast %cst_53 : f32 to vector<1x128xf32>
    %150 = arith.mulf %145, %149 : vector<1x128xf32>
    %cst_54 = arith.constant 1.562500e-02 : f32
    %151 = vector.broadcast %cst_54 : f32 to vector<1x128xf32>
    %152 = arith.mulf %148, %151 : vector<1x128xf32>
    %153 = arith.mulf %150, %150 : vector<1x128xf32>
    %154 = arith.subf %152, %153 : vector<1x128xf32>
    %cst_55 = arith.constant 9.99999974E-6 : f32
    %155 = vector.broadcast %cst_55 : f32 to vector<1x128xf32>
    %156 = arith.addf %154, %155 : vector<1x128xf32>
    %157 = math.rsqrt %156 : vector<1x128xf32>
    %158 = arith.mulf %142, %157 : vector<1x128xf32>
    %159 = arith.mulf %150, %158 : vector<1x128xf32>
    %160 = arith.subf %143, %159 : vector<1x128xf32>
    %161 = vector.broadcast %158 : vector<1x128xf32> to vector<64x128xf32>
    %162 = arith.mulf %141, %161 : vector<64x128xf32>
    %163 = vector.broadcast %160 : vector<1x128xf32> to vector<64x128xf32>
    %164 = arith.addf %162, %163 : vector<64x128xf32>
    %cst_56 = arith.constant 0.000000e+00 : f32
    %165 = vector.broadcast %cst_56 : f32 to vector<64x128xf32>
    %166 = arith.maximumf %164, %165 : vector<64x128xf32>
    %c2_57 = arith.constant 2 : index
    %c0_58 = arith.constant 0 : index
    %c0_59 = arith.constant 0 : index
    %167 = vector.load %arg4[%c2_57, %c0_58, %c0_59] : memref<3x128x128xf32, #tpu.memory_space<vmem>>, vector<1x128x128xf32>
    %168 = vector.shape_cast %167 : vector<1x128x128xf32> to vector<128x128xf32>
    %cst_60 = arith.constant dense<0.000000e+00> : vector<64x128xf32>
    %169 = tpu.matmul %166, %168, %cst_60 {dimension_numbers = #tpu.dot_dimension_numbers<[1], [0], [0], [1], [0, 0, 1, 1], [], []>} : vector<64x128xf32>, vector<128x128xf32>, vector<64x128xf32> -> vector<64x128xf32>
    %170 = vector.extract_strided_slice %1 {offsets = [6, 0], sizes = [1, 128], strides = [1, 1]} : vector<16x128xf32> to vector<1x128xf32>
    %171 = vector.extract_strided_slice %1 {offsets = [14, 0], sizes = [1, 128], strides = [1, 1]} : vector<16x128xf32> to vector<1x128xf32>
    %cst_61 = arith.constant dense<0.000000e+00> : vector<128xf32>
    %172 = vector.multi_reduction <add>, %169, %cst_61 [0] : vector<64x128xf32> to vector<128xf32>
    %173 = vector.shape_cast %172 : vector<128xf32> to vector<1x128xf32>
    %174 = arith.mulf %169, %169 : vector<64x128xf32>
    %cst_62 = arith.constant dense<0.000000e+00> : vector<128xf32>
    %175 = vector.multi_reduction <add>, %174, %cst_62 [0] : vector<64x128xf32> to vector<128xf32>
    %176 = vector.shape_cast %175 : vector<128xf32> to vector<1x128xf32>
    %cst_63 = arith.constant 1.562500e-02 : f32
    %177 = vector.broadcast %cst_63 : f32 to vector<1x128xf32>
    %178 = arith.mulf %173, %177 : vector<1x128xf32>
    %cst_64 = arith.constant 1.562500e-02 : f32
    %179 = vector.broadcast %cst_64 : f32 to vector<1x128xf32>
    %180 = arith.mulf %176, %179 : vector<1x128xf32>
    %181 = arith.mulf %178, %178 : vector<1x128xf32>
    %182 = arith.subf %180, %181 : vector<1x128xf32>
    %cst_65 = arith.constant 9.99999974E-6 : f32
    %183 = vector.broadcast %cst_65 : f32 to vector<1x128xf32>
    %184 = arith.addf %182, %183 : vector<1x128xf32>
    %185 = math.rsqrt %184 : vector<1x128xf32>
    %186 = arith.mulf %170, %185 : vector<1x128xf32>
    %187 = arith.mulf %178, %186 : vector<1x128xf32>
    %188 = arith.subf %171, %187 : vector<1x128xf32>
    %189 = vector.broadcast %186 : vector<1x128xf32> to vector<64x128xf32>
    %190 = arith.mulf %169, %189 : vector<64x128xf32>
    %191 = vector.broadcast %188 : vector<1x128xf32> to vector<64x128xf32>
    %192 = arith.addf %190, %191 : vector<64x128xf32>
    %193 = arith.addf %138, %192 : vector<64x128xf32>
    %c0_66 = arith.constant 0 : index
    %c0_67 = arith.constant 0 : index
    %194 = vector.load %arg5[%c0_66, %c0_67] : memref<128x128xf32, #tpu.memory_space<vmem>>, vector<128x128xf32>
    %cst_68 = arith.constant dense<0.000000e+00> : vector<64x128xf32>
    %195 = tpu.matmul %193, %194, %cst_68 {dimension_numbers = #tpu.dot_dimension_numbers<[1], [0], [0], [1], [0, 0, 1, 1], [], []>} : vector<64x128xf32>, vector<128x128xf32>, vector<64x128xf32> -> vector<64x128xf32>
    %c0_69 = arith.constant 0 : index
    %c0_70 = arith.constant 0 : index
    %196 = vector.load %arg6[%c0_69, %c0_70] : memref<1x128xf32, #tpu.memory_space<vmem>>, vector<1x128xf32>
    %197 = vector.broadcast %196 : vector<1x128xf32> to vector<64x128xf32>
    %198 = arith.addf %195, %197 : vector<64x128xf32>
    %c0_71 = arith.constant 0 : index
    %c0_72 = arith.constant 0 : index
    %199 = vector.load %arg1[%c0_71, %c0_72] : memref<64x1xf32, #tpu.memory_space<vmem>>, vector<64x1xf32>
    %cst_73 = arith.constant 1.000000e+00 : f32
    %200 = vector.broadcast %cst_73 : f32 to vector<64x1xf32>
    %201 = arith.divf %200, %199 : vector<64x1xf32>
    %202 = vector.broadcast %201 : vector<64x1xf32> to vector<64x128xf32>
    %203 = arith.mulf %198, %202 : vector<64x128xf32>
    %c0_74 = arith.constant 0 : index
    %c0_75 = arith.constant 0 : index
    %204 = vector.load %arg8[%c0_74, %c0_75] : memref<64x128xf32, #tpu.memory_space<vmem>>, vector<64x128xf32>
    tpu.vector_store %arg8[%c0_74, %c0_75], %203 {strides = array<i32>} : memref<64x128xf32, #tpu.memory_space<vmem>>, vector<64x128xf32>,
    return
  }
}

</mosaic_0001>

<llo_original>
// kernel: tpu_custom_call.1
$region0: #{tpu_custom_call.1}
  #allocation0 [shape = 'u32[]', space=smem, size = 0x4, offset = 0x4, fixed_abs, tag = 'smem constant byte address 0x4 - core index']
  #allocation1 [shape = 'u32[144,128]{1,0:T(1,128)}', space=vmem, size = 0x12000, scoped, tag = 'internal scratch']
  %s0 = inlined_call_operand.vmem [shape: f32[64,128], index: 0, kind: input, shape index: {}]
  %s1 = inlined_call_operand.vmem [shape: f32[64,1], index: 1, kind: input, shape index: {}]
  %s2 = inlined_call_operand.hbm [shape: f32[128,128], index: 2, kind: input, shape index: {}]
  %s3 = inlined_call_operand.hbm [shape: f32[3,128,128], index: 3, kind: input, shape index: {}]
  %s4 = inlined_call_operand.hbm [shape: f32[3,128,128], index: 4, kind: input, shape index: {}]
  %s5 = inlined_call_operand.hbm [shape: f32[128,128], index: 5, kind: input, shape index: {}]
  %s6 = inlined_call_operand.vmem [shape: f32[1,128], index: 6, kind: input, shape index: {}]
  %s7 = inlined_call_operand.hbm [shape: f32[16,128], index: 7, kind: input, shape index: {}]
  %s8 = inlined_call_operand.hbm [shape: f32[64,128], index: 8, kind: output, shape index: {}]
  %s9 = sld [smem:[#allocation0]]
  $region62: #{tpu_custom_call.1} parent=0
    _
  %s11 = ssub.s32 1, %s9
  %s12 = scalar_select 0, %s11, %s9
  $region1: #{tpu_custom_call.1} parent=0
    #allocation2 [shape = 'u8[65536]{0}', space=vmem, size = 0x10000, scoped, tag = 'input window, operand 2, single buffered']
    #allocation3 [shape = 's32[1]{0}', space=sflag, size = 0x4, scoped, tag = 'scoped memory for tpu_custom_call.1']
    #allocation4 [shape = 's32[1]{0}', space=sflag, size = 0x4, scoped, tag = 'scoped memory for tpu_custom_call.1']
    #allocation5 [shape = 'u8[196608]{0}', space=vmem, size = 0x30000, scoped, tag = 'input window, operand 3, single buffered']
    #allocation6 [shape = 's32[1]{0}', space=sflag, size = 0x4, scoped, tag = 'scoped memory for tpu_custom_call.1']
    #allocation7 [shape = 'u8[196608]{0}', space=vmem, size = 0x30000, scoped, tag = 'input window, operand 4, single buffered']
    #allocation8 [shape = 'u8[65536]{0}', space=vmem, size = 0x10000, scoped, tag = 'input window, operand 5, single buffered']
    #allocation9 [shape = 's32[1]{0}', space=sflag, size = 0x4, scoped, tag = 'scoped memory for tpu_custom_call.1']
    #allocation10 [shape = 'u8[8192]{0}', space=vmem, size = 0x2000, scoped, tag = 'input window, operand 7, single buffered']
    #allocation11 [shape = 'u8[32768]{0}', space=vmem, size = 0x8000, scoped, tag = 'output window, operand 0, single buffered']
    %13 = vsyncpa [#allocation3], 0
    %14 = vsyncpa [#allocation6], 0
    %15 = vsyncpa [#allocation9], 0
    %16 = vsyncpa [#allocation4], 0
    // Predicated region
    $region2: #{tpu_custom_call.1} parent=1 // pred_check
      _
    $region3: #{tpu_custom_call.1} parent=1 // pred_check_branch
      %18 = sbr.rel (0) target = $region5
    $region4: #{tpu_custom_call.1} parent=1 // pred_region
      _
    $region5: #{tpu_custom_call.1} parent=1 // pred_fallthru
      _
    // Predicated region
    $region6: #{tpu_custom_call.1} parent=1 // pred_check
      _
    $region7: #{tpu_custom_call.1} parent=1 // pred_check_branch
      %20 = sbr.rel (0) target = $region9
    $region8: #{tpu_custom_call.1} parent=1 // pred_region
      _
    $region9: #{tpu_custom_call.1} parent=1 // pred_fallthru
      _
    // Predicated region
    $region10: #{tpu_custom_call.1} parent=1 // pred_check
      _
    $region11: #{tpu_custom_call.1} parent=1 // pred_check_branch
      %22 = sbr.rel (0) target = $region13
    $region12: #{tpu_custom_call.1} parent=1 // pred_region
      %s24 = ssub.s32 2048, 2048
      %25 = vsyncadd [#allocation3], %s24
      %s26 = sshll.u32 [#allocation2], 4
      %s27 = int_to_ptr.vmem [resolvable:$true] %s26
      %32 = dma.hbm_to_vmem [thread:$0]  %s2, 2048, %s27, [#allocation3], 128, 128, 8
    $region13: #{tpu_custom_call.1} parent=1 // pred_fallthru
      _
    // Predicated region
    $region14: #{tpu_custom_call.1} parent=1 // pred_check
      _
    $region15: #{tpu_custom_call.1} parent=1 // pred_check_branch
      %34 = sbr.rel (0) target = $region17
    $region16: #{tpu_custom_call.1} parent=1 // pred_region
      %s36 = ssub.s32 6144, 6144
      %37 = vsyncadd [#allocation6], %s36
      %s38 = sshll.u32 [#allocation5], 4
      %s39 = int_to_ptr.vmem [resolvable:$true] %s38
      %44 = dma.hbm_to_vmem [thread:$0]  %s3, 6144, %s39, [#allocation6], 128, 128, 8
    $region17: #{tpu_custom_call.1} parent=1 // pred_fallthru
      _
    // Predicated region
    $region18: #{tpu_custom_call.1} parent=1 // pred_check
      _
    $region19: #{tpu_custom_call.1} parent=1 // pred_check_branch
      %46 = sbr.rel (0) target = $region21
    $region20: #{tpu_custom_call.1} parent=1 // pred_region
      %s48 = ssub.s32 6144, 6144
      %49 = vsyncadd [#allocation6], %s48
      %s50 = sshll.u32 [#allocation7], 4
      %s51 = int_to_ptr.vmem [resolvable:$true] %s50
      %56 = dma.hbm_to_vmem [thread:$0]  %s4, 6144, %s51, [#allocation6], 128, 128, 8
    $region21: #{tpu_custom_call.1} parent=1 // pred_fallthru
      _
    // Predicated region
    $region22: #{tpu_custom_call.1} parent=1 // pred_check
      _
    $region23: #{tpu_custom_call.1} parent=1 // pred_check_branch
      %58 = sbr.rel (0) target = $region25
    $region24: #{tpu_custom_call.1} parent=1 // pred_region
      %s60 = ssub.s32 2048, 2048
      %61 = vsyncadd [#allocation9], %s60
      %s62 = sshll.u32 [#allocation8], 4
      %s63 = int_to_ptr.vmem [resolvable:$true] %s62
      %68 = dma.hbm_to_vmem [thread:$0]  %s5, 2048, %s63, [#allocation9], 128, 128, 8
    $region25: #{tpu_custom_call.1} parent=1 // pred_fallthru
      _
    // Predicated region
    $region26: #{tpu_custom_call.1} parent=1 // pred_check
      _
    $region27: #{tpu_custom_call.1} parent=1 // pred_check_branch
      %70 = sbr.rel (0) target = $region29
    $region28: #{tpu_custom_call.1} parent=1 // pred_region
      _
    $region29: #{tpu_custom_call.1} parent=1 // pred_fallthru
      _
    // Predicated region
    $region30: #{tpu_custom_call.1} parent=1 // pred_check
      _
    $region31: #{tpu_custom_call.1} parent=1 // pred_check_branch
      %72 = sbr.rel (0) target = $region33
    $region32: #{tpu_custom_call.1} parent=1 // pred_region
      %s74 = ssub.s32 256, 256
      %75 = vsyncadd [#allocation9], %s74
      %s76 = sshll.u32 [#allocation10], 4
      %s77 = int_to_ptr.vmem [resolvable:$true] %s76
      %82 = dma.hbm_to_vmem [thread:$0]  %s7, 256, %s77, [#allocation9], 128, 128, 8
    $region33: #{tpu_custom_call.1} parent=1 // pred_fallthru
      _
    // Predicated region
    $region34: #{tpu_custom_call.1} parent=1 // pred_check
      _
    $region35: #{tpu_custom_call.1} parent=1 // pred_check_branch
      %84 = sbr.rel (0) target = $region37
    $region36: #{tpu_custom_call.1} parent=1 // pred_region
      %85 = dma.done [#allocation3], 2048
    $region37: #{tpu_custom_call.1} parent=1 // pred_fallthru
      _
    // Predicated region
    $region38: #{tpu_custom_call.1} parent=1 // pred_check
      _
    $region39: #{tpu_custom_call.1} parent=1 // pred_check_branch
      %87 = sbr.rel (0) target = $region41
    $region40: #{tpu_custom_call.1} parent=1 // pred_region
      %88 = dma.done [#allocation6], 6144
    $region41: #{tpu_custom_call.1} parent=1 // pred_fallthru
      _
    // Predicated region
    $region42: #{tpu_custom_call.1} parent=1 // pred_check
      _
    $region43: #{tpu_custom_call.1} parent=1 // pred_check_branch
      %90 = sbr.rel (0) target = $region45
    $region44: #{tpu_custom_call.1} parent=1 // pred_region
      %91 = dma.done [#allocation6], 6144
    $region45: #{tpu_custom_call.1} parent=1 // pred_fallthru
      _
    // Predicated region
    $region46: #{tpu_custom_call.1} parent=1 // pred_check
      _
    $region47: #{tpu_custom_call.1} parent=1 // pred_check_branch
      %93 = sbr.rel (0) target = $region49
    $region48: #{tpu_custom_call.1} parent=1 // pred_region
      %94 = dma.done [#allocation9], 2048
    $region49: #{tpu_custom_call.1} parent=1 // pred_fallthru
      _
    // Predicated region
    $region50: #{tpu_custom_call.1} parent=1 // pred_check
      _
    $region51: #{tpu_custom_call.1} parent=1 // pred_check_branch
      %96 = sbr.rel (0) target = $region53
    $region52: #{tpu_custom_call.1} parent=1 // pred_region
      %97 = dma.done [#allocation9], 256
    $region53: #{tpu_custom_call.1} parent=1 // pred_fallthru
      _
    %v98 = vld [vmem:[%s0] sm:$0xff]
    %v99 = vld [vmem:[%s0 + $0x8] sm:$0xff]
    %v100 = vld [vmem:[%s0 + $0x10] sm:$0xff]
    %v101 = vld [vmem:[%s0 + $0x18] sm:$0xff]
    %v102 = vld [vmem:[%s0 + $0x20] sm:$0xff]
    %v103 = vld [vmem:[%s0 + $0x28] sm:$0xff]
    %v104 = vld [vmem:[%s0 + $0x30] sm:$0xff]
    %v105 = vld [vmem:[%s0 + $0x38] sm:$0xff]
    %v106 = vld [vmem:[#allocation10] sm:$0xff]
    %v107 = vld [vmem:[#allocation10 + $0x8] sm:$0xff]
    %v108 = vld [vmem:[#allocation2] sm:$0xff]
    %v109 = vld [vmem:[#allocation2 + $0x8] sm:$0xff]
    %v110 = vld [vmem:[#allocation2 + $0x10] sm:$0xff]
    %v111 = vld [vmem:[#allocation2 + $0x18] sm:$0xff]
    %v112 = vld [vmem:[#allocation2 + $0x20] sm:$0xff]
    %v113 = vld [vmem:[#allocation2 + $0x28] sm:$0xff]
    %v114 = vld [vmem:[#allocation2 + $0x30] sm:$0xff]
    %v115 = vld [vmem:[#allocation2 + $0x38] sm:$0xff]
    %v116 = vld [vmem:[#allocation2 + $0x40] sm:$0xff]
    %v117 = vld [vmem:[#allocation2 + $0x48] sm:$0xff]
    %v118 = vld [vmem:[#allocation2 + $0x50] sm:$0xff]
    %v119 = vld [vmem:[#allocation2 + $0x58] sm:$0xff]
    %v120 = vld [vmem:[#allocation2 + $0x60] sm:$0xff]
    %v121 = vld [vmem:[#allocation2 + $0x68] sm:$0xff]
    %v122 = vld [vmem:[#allocation2 + $0x70] sm:$0xff]
    %v123 = vld [vmem:[#allocation2 + $0x78] sm:$0xff]
    %124 = vmatprep.subr.mxu0 0.0
    %125 = vmatpush1.msra.mxu0 %v123
    %126 = vmatprep.subr.mxu0 0.0
    %127 = vmatpush1.msra.mxu0 %v122
    %128 = vmatprep.subr.mxu0 0.0
    %129 = vmatpush1.msra.mxu0 %v121
    %130 = vmatprep.subr.mxu0 0.0
    %131 = vmatpush1.msra.mxu0 %v120
    %132 = vmatprep.subr.mxu0 0.0
    %133 = vmatpush1.msra.mxu0 %v119
    %134 = vmatprep.subr.mxu0 0.0
    %135 = vmatpush1.msra.mxu0 %v118
    %136 = vmatprep.subr.mxu0 0.0
    %137 = vmatpush1.msra.mxu0 %v117
    %138 = vmatprep.subr.mxu0 0.0
    %139 = vmatpush1.msra.mxu0 %v116
    %140 = vmatprep.subr.mxu0 0.0
    %141 = vmatpush1.msra.mxu0 %v115
    %142 = vmatprep.subr.mxu0 0.0
    %143 = vmatpush1.msra.mxu0 %v114
    %144 = vmatprep.subr.mxu0 0.0
    %145 = vmatpush1.msra.mxu0 %v113
    %146 = vmatprep.subr.mxu0 0.0
    %147 = vmatpush1.msra.mxu0 %v112
    %148 = vmatprep.subr.mxu0 0.0
    %149 = vmatpush1.msra.mxu0 %v111
    %150 = vmatprep.subr.mxu0 0.0
    %151 = vmatpush1.msra.mxu0 %v110
    %152 = vmatprep.subr.mxu0 0.0
    %153 = vmatpush1.msra.mxu0 %v109
    %154 = vmatprep.subr.mxu0 0.0
    %155 = vmatpush1.msra.mxu0 %v108
    %156 = vmatprep.subr.mxu0 0.0
    %157 = vmatpush2.msra.mxu0 0.0
    %158 = vmatprep.subr.mxu0 0.0
    %159 = vmatpush2.msra.mxu0 0.0
    %160 = vmatprep.subr.mxu0 0.0
    %161 = vmatpush2.msra.mxu0 0.0
    %162 = vmatprep.subr.mxu0 0.0
    %163 = vmatpush2.msra.mxu0 0.0
    %164 = vmatprep.subr.mxu0 0.0
    %165 = vmatpush2.msra.mxu0 0.0
    %166 = vmatprep.subr.mxu0 0.0
    %167 = vmatpush2.msra.mxu0 0.0
    %168 = vmatprep.subr.mxu0 0.0
    %169 = vmatpush2.msra.mxu0 0.0
    %170 = vmatprep.subr.mxu0 0.0
    %171 = vmatpush2.msra.mxu0 0.0
    %172 = vmatprep.subr.mxu0 0.0
    %173 = vmatpush2.msra.mxu0 0.0
    %174 = vmatprep.subr.mxu0 0.0
    %175 = vmatpush2.msra.mxu0 0.0
    %176 = vmatprep.subr.mxu0 0.0
    %177 = vmatpush2.msra.mxu0 0.0
    %178 = vmatprep.subr.mxu0 0.0
    %179 = vmatpush2.msra.mxu0 0.0
    %180 = vmatprep.subr.mxu0 0.0
    %181 = vmatpush2.msra.mxu0 0.0
    %182 = vmatprep.subr.mxu0 0.0
    %183 = vmatpush2.msra.mxu0 0.0
    %184 = vmatprep.subr.mxu0 0.0
    %185 = vmatpush2.msra.mxu0 0.0
    %186 = vmatprep.subr.mxu0 0.0
    %187 = vmatpush2.msra.mxu0 0.0
    %188 = vmatprep.mubr.f32.mxu0 0.0
    %189 = vmatmul.mubr.f32.gmra.mxu0 %v98
    %v190 = vpop.f32.mrf.mxu0
    %v191 = vadd.f32 0.0, %v190
    %v192 = vpop.f32.mrf.mxu0
    %193 = vmatprep.mubr.f32.mxu0 0.0
    %194 = vmatmul.mubr.f32.gmra.mxu0 %v99
    %v195 = vpop.f32.mrf.mxu0
    %v196 = vadd.f32 0.0, %v195
    %v197 = vpop.f32.mrf.mxu0
    %198 = vmatprep.mubr.f32.mxu0 0.0
    %199 = vmatmul.mubr.f32.gmra.mxu0 %v100
    %v200 = vpop.f32.mrf.mxu0
    %v201 = vadd.f32 0.0, %v200
    %v202 = vpop.f32.mrf.mxu0
    %203 = vmatprep.mubr.f32.mxu0 0.0
    %204 = vmatmul.mubr.f32.gmra.mxu0 %v101
    %v205 = vpop.f32.mrf.mxu0
    %v206 = vadd.f32 0.0, %v205
    %v207 = vpop.f32.mrf.mxu0
    %208 = vmatprep.mubr.f32.mxu0 0.0
    %209 = vmatmul.mubr.f32.gmra.mxu0 %v102
    %v210 = vpop.f32.mrf.mxu0
    %v211 = vadd.f32 0.0, %v210
    %v212 = vpop.f32.mrf.mxu0
    %213 = vmatprep.mubr.f32.mxu0 0.0
    %214 = vmatmul.mubr.f32.gmra.mxu0 %v103
    %v215 = vpop.f32.mrf.mxu0
    %v216 = vadd.f32 0.0, %v215
    %v217 = vpop.f32.mrf.mxu0
    %218 = vmatprep.mubr.f32.mxu0 0.0
    %219 = vmatmul.mubr.f32.gmra.mxu0 %v104
    %v220 = vpop.f32.mrf.mxu0
    %v221 = vadd.f32 0.0, %v220
    %v222 = vpop.f32.mrf.mxu0
    %223 = vmatprep.mubr.f32.mxu0 0.0
    %224 = vmatmul.mubr.f32.gmra.mxu0 %v105
    %v225 = vpop.f32.mrf.mxu0
    %v226 = vadd.f32 0.0, %v225
    %v227 = vpop.f32.mrf.mxu0
    %228 = vdwg.mxu0
    %v229 = vadd.f32 %v191, %v196
    %v230 = vadd.f32 %v229, %v201
    %v231 = vadd.f32 %v230, %v206
    %v232 = vadd.f32 %v231, %v211
    %v233 = vadd.f32 %v232, %v216
    %v234 = vadd.f32 %v233, %v221
    %v235 = vadd.f32 %v234, %v226
    %v236 = vrot.slane %v235, 4
    %v237 = vadd.f32 %v235, %v236
    %v238 = vrot.slane %v237, 2
    %v239 = vadd.f32 %v237, %v238
    %v240 = vrot.slane %v239, 1
    %v241 = vadd.f32 %v239, %v240
    %v242 = vmul.f32 %v191, %v191
    %v243 = vmul.f32 %v196, %v196
    %v244 = vmul.f32 %v201, %v201
    %v245 = vmul.f32 %v206, %v206
    %v246 = vmul.f32 %v211, %v211
    %v247 = vmul.f32 %v216, %v216
    %v248 = vmul.f32 %v221, %v221
    %v249 = vmul.f32 %v226, %v226
    %v250 = vadd.f32 %v242, %v243
    %v251 = vadd.f32 %v250, %v244
    %v252 = vadd.f32 %v251, %v245
    %v253 = vadd.f32 %v252, %v246
    %v254 = vadd.f32 %v253, %v247
    %v255 = vadd.f32 %v254, %v248
    %v256 = vadd.f32 %v255, %v249
    %v257 = vrot.slane %v256, 4
    %v258 = vadd.f32 %v256, %v257
    %v259 = vrot.slane %v258, 2
    %v260 = vadd.f32 %v258, %v259
    %v261 = vrot.slane %v260, 1
    %v262 = vadd.f32 %v260, %v261
    %v263 = vmul.f32 %v241, 0.015625
    %v264 = vmul.f32 %v262, 0.015625
    %v265 = vmul.f32 %v263, %v263
    %v266 = vsub.f32 %v264, %v265
    %v267 = vadd.f32 %v266, 1e-05
    %v268 = vrsqrt.pop %v267
    %v269 = vmul.f32 %v106, %v268
    %v270 = vmul.f32 %v263, %v269
    %v271 = vsub.f32 %v107, %v270
    %v272 = vlaneseq
    %v273 = vshrl.u32 %v272, 7
    %v274 = vsub.s32 0, %v273
    %v275 = vrot.slane %v269, %v274
    %v276 = vmul.f32 %v191, %v275
    %v277 = vmul.f32 %v196, %v275
    %v278 = vmul.f32 %v201, %v275
    %v279 = vmul.f32 %v206, %v275
    %v280 = vmul.f32 %v211, %v275
    %v281 = vmul.f32 %v216, %v275
    %v282 = vmul.f32 %v221, %v275
    %v283 = vmul.f32 %v226, %v275
    %v284 = vlaneseq
    %v285 = vshrl.u32 %v284, 7
    %v286 = vsub.s32 0, %v285
    %v287 = vrot.slane %v271, %v286
    %v288 = vadd.f32 %v276, %v287
    %v289 = vadd.f32 %v277, %v287
    %v290 = vadd.f32 %v278, %v287
    %v291 = vadd.f32 %v279, %v287
    %v292 = vadd.f32 %v280, %v287
    %v293 = vadd.f32 %v281, %v287
    %v294 = vadd.f32 %v282, %v287
    %v295 = vadd.f32 %v283, %v287
    %v296 = vmax.f32 %v288, 0.0
    %v297 = vmax.f32 %v289, 0.0
    %v298 = vmax.f32 %v290, 0.0
    %v299 = vmax.f32 %v291, 0.0
    %v300 = vmax.f32 %v292, 0.0
    %v301 = vmax.f32 %v293, 0.0
    %v302 = vmax.f32 %v294, 0.0
    %v303 = vmax.f32 %v295, 0.0
    %v304 = vld [vmem:[#allocation5] sm:$0xff]
    %v305 = vld [vmem:[#allocation5 + $0x8] sm:$0xff]
    %v306 = vld [vmem:[#allocation5 + $0x10] sm:$0xff]
    %v307 = vld [vmem:[#allocation5 + $0x18] sm:$0xff]
    %v308 = vld [vmem:[#allocation5 + $0x20] sm:$0xff]
    %v309 = vld [vmem:[#allocation5 + $0x28] sm:$0xff]
    %v310 = vld [vmem:[#allocation5 + $0x30] sm:$0xff]
    %v311 = vld [vmem:[#allocation5 + $0x38] sm:$0xff]
    %v312 = vld [vmem:[#allocation5 + $0x40] sm:$0xff]
    %v313 = vld [vmem:[#allocation5 + $0x48] sm:$0xff]
    %v314 = vld [vmem:[#allocation5 + $0x50] sm:$0xff]
    %v315 = vld [vmem:[#allocation5 + $0x58] sm:$0xff]
    %v316 = vld [vmem:[#allocation5 + $0x60] sm:$0xff]
    %v317 = vld [vmem:[#allocation5 + $0x68] sm:$0xff]
    %v318 = vld [vmem:[#allocation5 + $0x70] sm:$0xff]
    %v319 = vld [vmem:[#allocation5 + $0x78] sm:$0xff]
    %320 = vmatprep.subr.mxu0 0.0
    %321 = vmatpush1.msra.mxu0 %v319
    %322 = vmatprep.subr.mxu0 0.0
    %323 = vmatpush1.msra.mxu0 %v318
    %324 = vmatprep.subr.mxu0 0.0
    %325 = vmatpush1.msra.mxu0 %v317
    %326 = vmatprep.subr.mxu0 0.0
    %327 = vmatpush1.msra.mxu0 %v316
    %328 = vmatprep.subr.mxu0 0.0
    %329 = vmatpush1.msra.mxu0 %v315
    %330 = vmatprep.subr.mxu0 0.0
    %331 = vmatpush1.msra.mxu0 %v314
    %332 = vmatprep.subr.mxu0 0.0
    %333 = vmatpush1.msra.mxu0 %v313
    %334 = vmatprep.subr.mxu0 0.0
    %335 = vmatpush1.msra.mxu0 %v312
    %336 = vmatprep.subr.mxu0 0.0
    %337 = vmatpush1.msra.mxu0 %v311
    %338 = vmatprep.subr.mxu0 0.0
    %339 = vmatpush1.msra.mxu0 %v310
    %340 = vmatprep.subr.mxu0 0.0
    %341 = vmatpush1.msra.mxu0 %v309
    %342 = vmatprep.subr.mxu0 0.0
    %343 = vmatpush1.msra.mxu0 %v308
    %344 = vmatprep.subr.mxu0 0.0
    %345 = vmatpush1.msra.mxu0 %v307
    %346 = vmatprep.subr.mxu0 0.0
    %347 = vmatpush1.msra.mxu0 %v306
    %348 = vmatprep.subr.mxu0 0.0
    %349 = vmatpush1.msra.mxu0 %v305
    %350 = vmatprep.subr.mxu0 0.0
    %351 = vmatpush1.msra.mxu0 %v304
    %352 = vmatprep.subr.mxu0 0.0
    %353 = vmatpush2.msra.mxu0 0.0
    %354 = vmatprep.subr.mxu0 0.0
    %355 = vmatpush2.msra.mxu0 0.0
    %356 = vmatprep.subr.mxu0 0.0
    %357 = vmatpush2.msra.mxu0 0.0
    %358 = vmatprep.subr.mxu0 0.0
    %359 = vmatpush2.msra.mxu0 0.0
    %360 = vmatprep.subr.mxu0 0.0
    %361 = vmatpush2.msra.mxu0 0.0
    %362 = vmatprep.subr.mxu0 0.0
    %363 = vmatpush2.msra.mxu0 0.0
    %364 = vmatprep.subr.mxu0 0.0
    %365 = vmatpush2.msra.mxu0 0.0
    %366 = vmatprep.subr.mxu0 0.0
    %367 = vmatpush2.msra.mxu0 0.0
    %368 = vmatprep.subr.mxu0 0.0
    %369 = vmatpush2.msra.mxu0 0.0
    %370 = vmatprep.subr.mxu0 0.0
    %371 = vmatpush2.msra.mxu0 0.0
    %372 = vmatprep.subr.mxu0 0.0
    %373 = vmatpush2.msra.mxu0 0.0
    %374 = vmatprep.subr.mxu0 0.0
    %375 = vmatpush2.msra.mxu0 0.0
    %376 = vmatprep.subr.mxu0 0.0
    %377 = vmatpush2.msra.mxu0 0.0
    %378 = vmatprep.subr.mxu0 0.0
    %379 = vmatpush2.msra.mxu0 0.0
    %380 = vmatprep.subr.mxu0 0.0
    %381 = vmatpush2.msra.mxu0 0.0
    %382 = vmatprep.subr.mxu0 0.0
    %383 = vmatpush2.msra.mxu0 0.0
    %384 = vmatprep.mubr.f32.mxu0 0.0
    %385 = vmatmul.mubr.f32.gmra.mxu0 %v296
    %v386 = vpop.f32.mrf.mxu0
    %v387 = vadd.f32 0.0, %v386
    %v388 = vpop.f32.mrf.mxu0
    %389 = vmatprep.mubr.f32.mxu0 0.0
    %390 = vmatmul.mubr.f32.gmra.mxu0 %v297
    %v391 = vpop.f32.mrf.mxu0
    %v392 = vadd.f32 0.0, %v391
    %v393 = vpop.f32.mrf.mxu0
    %394 = vmatprep.mubr.f32.mxu0 0.0
    %395 = vmatmul.mubr.f32.gmra.mxu0 %v298
    %v396 = vpop.f32.mrf.mxu0
    %v397 = vadd.f32 0.0, %v396
    %v398 = vpop.f32.mrf.mxu0
    %399 = vmatprep.mubr.f32.mxu0 0.0
    %400 = vmatmul.mubr.f32.gmra.mxu0 %v299
    %v401 = vpop.f32.mrf.mxu0
    %v402 = vadd.f32 0.0, %v401
    %v403 = vpop.f32.mrf.mxu0
    %404 = vmatprep.mubr.f32.mxu0 0.0
    %405 = vmatmul.mubr.f32.gmra.mxu0 %v300
    %v406 = vpop.f32.mrf.mxu0
    %v407 = vadd.f32 0.0, %v406
    %v408 = vpop.f32.mrf.mxu0
    %409 = vmatprep.mubr.f32.mxu0 0.0
    %410 = vmatmul.mubr.f32.gmra.mxu0 %v301
    %v411 = vpop.f32.mrf.mxu0
    %v412 = vadd.f32 0.0, %v411
    %v413 = vpop.f32.mrf.mxu0
    %414 = vmatprep.mubr.f32.mxu0 0.0
    %415 = vmatmul.mubr.f32.gmra.mxu0 %v302
    %v416 = vpop.f32.mrf.mxu0
    %v417 = vadd.f32 0.0, %v416
    %v418 = vpop.f32.mrf.mxu0
    %419 = vmatprep.mubr.f32.mxu0 0.0
    %420 = vmatmul.mubr.f32.gmra.mxu0 %v303
    %v421 = vpop.f32.mrf.mxu0
    %v422 = vadd.f32 0.0, %v421
    %v423 = vpop.f32.mrf.mxu0
    %424 = vdwg.mxu0
    %v425 = vadd.f32 %v387, %v392
    %v426 = vadd.f32 %v425, %v397
    %v427 = vadd.f32 %v426, %v402
    %v428 = vadd.f32 %v427, %v407
    %v429 = vadd.f32 %v428, %v412
    %v430 = vadd.f32 %v429, %v417
    %v431 = vadd.f32 %v430, %v422
    %v432 = vrot.slane %v431, 4
    %v433 = vadd.f32 %v431, %v432
    %v434 = vrot.slane %v433, 2
    %v435 = vadd.f32 %v433, %v434
    %v436 = vrot.slane %v435, 1
    %v437 = vadd.f32 %v435, %v436
    %v438 = vmul.f32 %v387, %v387
    %v439 = vmul.f32 %v392, %v392
    %v440 = vmul.f32 %v397, %v397
    %v441 = vmul.f32 %v402, %v402
    %v442 = vmul.f32 %v407, %v407
    %v443 = vmul.f32 %v412, %v412
    %v444 = vmul.f32 %v417, %v417
    %v445 = vmul.f32 %v422, %v422
    %v446 = vadd.f32 %v438, %v439
    %v447 = vadd.f32 %v446, %v440
    %v448 = vadd.f32 %v447, %v441
    %v449 = vadd.f32 %v448, %v442
    %v450 = vadd.f32 %v449, %v443
    %v451 = vadd.f32 %v450, %v444
    %v452 = vadd.f32 %v451, %v445
    %v453 = vrot.slane %v452, 4
    %v454 = vadd.f32 %v452, %v453
    %v455 = vrot.slane %v454, 2
    %v456 = vadd.f32 %v454, %v455
    %v457 = vrot.slane %v456, 1
    %v458 = vadd.f32 %v456, %v457
    %v459 = vmul.f32 %v437, 0.015625
    %v460 = vmul.f32 %v458, 0.015625
    %v461 = vmul.f32 %v459, %v459
    %v462 = vsub.f32 %v460, %v461
    %v463 = vadd.f32 %v462, 1e-05
    %v464 = vrsqrt.pop %v463
    %v465 = vmul.f32 %v106, %v464
    %v466 = vmul.f32 %v459, %v465
    %v467 = vsub.f32 %v107, %v466
    %v468 = vlaneseq
    %v469 = vshrl.u32 %v468, 7
    %v470 = vsub.s32 1, %v469
    %v471 = vrot.slane %v465, %v470
    %v472 = vmul.f32 %v387, %v471
    %v473 = vmul.f32 %v392, %v471
    %v474 = vmul.f32 %v397, %v471
    %v475 = vmul.f32 %v402, %v471
    %v476 = vmul.f32 %v407, %v471
    %v477 = vmul.f32 %v412, %v471
    %v478 = vmul.f32 %v417, %v471
    %v479 = vmul.f32 %v422, %v471
    %v480 = vlaneseq
    %v481 = vshrl.u32 %v480, 7
    %v482 = vsub.s32 1, %v481
    %v483 = vrot.slane %v467, %v482
    %v484 = vadd.f32 %v472, %v483
    %v485 = vadd.f32 %v473, %v483
    %v486 = vadd.f32 %v474, %v483
    %v487 = vadd.f32 %v475, %v483
    %v488 = vadd.f32 %v476, %v483
    %v489 = vadd.f32 %v477, %v483
    %v490 = vadd.f32 %v478, %v483
    %v491 = vadd.f32 %v479, %v483
    %v492 = vmax.f32 %v484, 0.0
    %v493 = vmax.f32 %v485, 0.0
    %v494 = vmax.f32 %v486, 0.0
    %v495 = vmax.f32 %v487, 0.0
    %v496 = vmax.f32 %v488, 0.0
    %v497 = vmax.f32 %v489, 0.0
    %v498 = vmax.f32 %v490, 0.0
    %v499 = vmax.f32 %v491, 0.0
    %v500 = vld [vmem:[#allocation7] sm:$0xff]
    %v501 = vld [vmem:[#allocation7 + $0x8] sm:$0xff]
    %v502 = vld [vmem:[#allocation7 + $0x10] sm:$0xff]
    %v503 = vld [vmem:[#allocation7 + $0x18] sm:$0xff]
    %v504 = vld [vmem:[#allocation7 + $0x20] sm:$0xff]
    %v505 = vld [vmem:[#allocation7 + $0x28] sm:$0xff]
    %v506 = vld [vmem:[#allocation7 + $0x30] sm:$0xff]
    %v507 = vld [vmem:[#allocation7 + $0x38] sm:$0xff]
    %v508 = vld [vmem:[#allocation7 + $0x40] sm:$0xff]
    %v509 = vld [vmem:[#allocation7 + $0x48] sm:$0xff]
    %v510 = vld [vmem:[#allocation7 + $0x50] sm:$0xff]
    %v511 = vld [vmem:[#allocation7 + $0x58] sm:$0xff]
    %v512 = vld [vmem:[#allocation7 + $0x60] sm:$0xff]
    %v513 = vld [vmem:[#allocation7 + $0x68] sm:$0xff]
    %v514 = vld [vmem:[#allocation7 + $0x70] sm:$0xff]
    %v515 = vld [vmem:[#allocation7 + $0x78] sm:$0xff]
    %516 = vmatprep.subr.mxu0 0.0
    %517 = vmatpush1.msra.mxu0 %v515
    %518 = vmatprep.subr.mxu0 0.0
    %519 = vmatpush1.msra.mxu0 %v514
    %520 = vmatprep.subr.mxu0 0.0
    %521 = vmatpush1.msra.mxu0 %v513
    %522 = vmatprep.subr.mxu0 0.0
    %523 = vmatpush1.msra.mxu0 %v512
    %524 = vmatprep.subr.mxu0 0.0
    %525 = vmatpush1.msra.mxu0 %v511
    %526 = vmatprep.subr.mxu0 0.0
    %527 = vmatpush1.msra.mxu0 %v510
    %528 = vmatprep.subr.mxu0 0.0
    %529 = vmatpush1.msra.mxu0 %v509
    %530 = vmatprep.subr.mxu0 0.0
    %531 = vmatpush1.msra.mxu0 %v508
    %532 = vmatprep.subr.mxu0 0.0
    %533 = vmatpush1.msra.mxu0 %v507
    %534 = vmatprep.subr.mxu0 0.0
    %535 = vmatpush1.msra.mxu0 %v506
    %536 = vmatprep.subr.mxu0 0.0
    %537 = vmatpush1.msra.mxu0 %v505
    %538 = vmatprep.subr.mxu0 0.0
    %539 = vmatpush1.msra.mxu0 %v504
    %540 = vmatprep.subr.mxu0 0.0
    %541 = vmatpush1.msra.mxu0 %v503
    %542 = vmatprep.subr.mxu0 0.0
    %543 = vmatpush1.msra.mxu0 %v502
    %544 = vmatprep.subr.mxu0 0.0
    %545 = vmatpush1.msra.mxu0 %v501
    %546 = vmatprep.subr.mxu0 0.0
    %547 = vmatpush1.msra.mxu0 %v500
    %548 = vmatprep.subr.mxu0 0.0
    %549 = vmatpush2.msra.mxu0 0.0
    %550 = vmatprep.subr.mxu0 0.0
    %551 = vmatpush2.msra.mxu0 0.0
    %552 = vmatprep.subr.mxu0 0.0
    %553 = vmatpush2.msra.mxu0 0.0
    %554 = vmatprep.subr.mxu0 0.0
    %555 = vmatpush2.msra.mxu0 0.0
    %556 = vmatprep.subr.mxu0 0.0
    %557 = vmatpush2.msra.mxu0 0.0
    %558 = vmatprep.subr.mxu0 0.0
    %559 = vmatpush2.msra.mxu0 0.0
    %560 = vmatprep.subr.mxu0 0.0
    %561 = vmatpush2.msra.mxu0 0.0
    %562 = vmatprep.subr.mxu0 0.0
    %563 = vmatpush2.msra.mxu0 0.0
    %564 = vmatprep.subr.mxu0 0.0
    %565 = vmatpush2.msra.mxu0 0.0
    %566 = vmatprep.subr.mxu0 0.0
    %567 = vmatpush2.msra.mxu0 0.0
    %568 = vmatprep.subr.mxu0 0.0
    %569 = vmatpush2.msra.mxu0 0.0
    %570 = vmatprep.subr.mxu0 0.0
    %571 = vmatpush2.msra.mxu0 0.0
    %572 = vmatprep.subr.mxu0 0.0
    %573 = vmatpush2.msra.mxu0 0.0
    %574 = vmatprep.subr.mxu0 0.0
    %575 = vmatpush2.msra.mxu0 0.0
    %576 = vmatprep.subr.mxu0 0.0
    %577 = vmatpush2.msra.mxu0 0.0
    %578 = vmatprep.subr.mxu0 0.0
    %579 = vmatpush2.msra.mxu0 0.0
    %580 = vmatprep.mubr.f32.mxu0 0.0
    %581 = vmatmul.mubr.f32.gmra.mxu0 %v492
    %v582 = vpop.f32.mrf.mxu0
    %v583 = vadd.f32 0.0, %v582
    %v584 = vpop.f32.mrf.mxu0
    %585 = vmatprep.mubr.f32.mxu0 0.0
    %586 = vmatmul.mubr.f32.gmra.mxu0 %v493
    %v587 = vpop.f32.mrf.mxu0
    %v588 = vadd.f32 0.0, %v587
    %v589 = vpop.f32.mrf.mxu0
    %590 = vmatprep.mubr.f32.mxu0 0.0
    %591 = vmatmul.mubr.f32.gmra.mxu0 %v494
    %v592 = vpop.f32.mrf.mxu0
    %v593 = vadd.f32 0.0, %v592
    %v594 = vpop.f32.mrf.mxu0
    %595 = vmatprep.mubr.f32.mxu0 0.0
    %596 = vmatmul.mubr.f32.gmra.mxu0 %v495
    %v597 = vpop.f32.mrf.mxu0
    %v598 = vadd.f32 0.0, %v597
    %v599 = vpop.f32.mrf.mxu0
    %600 = vmatprep.mubr.f32.mxu0 0.0
    %601 = vmatmul.mubr.f32.gmra.mxu0 %v496
    %v602 = vpop.f32.mrf.mxu0
    %v603 = vadd.f32 0.0, %v602
    %v604 = vpop.f32.mrf.mxu0
    %605 = vmatprep.mubr.f32.mxu0 0.0
    %606 = vmatmul.mubr.f32.gmra.mxu0 %v497
    %v607 = vpop.f32.mrf.mxu0
    %v608 = vadd.f32 0.0, %v607
    %v609 = vpop.f32.mrf.mxu0
    %610 = vmatprep.mubr.f32.mxu0 0.0
    %611 = vmatmul.mubr.f32.gmra.mxu0 %v498
    %v612 = vpop.f32.mrf.mxu0
    %v613 = vadd.f32 0.0, %v612
    %v614 = vpop.f32.mrf.mxu0
    %615 = vmatprep.mubr.f32.mxu0 0.0
    %616 = vmatmul.mubr.f32.gmra.mxu0 %v499
    %v617 = vpop.f32.mrf.mxu0
    %v618 = vadd.f32 0.0, %v617
    %v619 = vpop.f32.mrf.mxu0
    %620 = vdwg.mxu0
    %v621 = vadd.f32 %v583, %v588
    %v622 = vadd.f32 %v621, %v593
    %v623 = vadd.f32 %v622, %v598
    %v624 = vadd.f32 %v623, %v603
    %v625 = vadd.f32 %v624, %v608
    %v626 = vadd.f32 %v625, %v613
    %v627 = vadd.f32 %v626, %v618
    %v628 = vrot.slane %v627, 4
    %v629 = vadd.f32 %v627, %v628
    %v630 = vrot.slane %v629, 2
    %v631 = vadd.f32 %v629, %v630
    %v632 = vrot.slane %v631, 1
    %v633 = vadd.f32 %v631, %v632
    %v634 = vmul.f32 %v583, %v583
    %v635 = vmul.f32 %v588, %v588
    %v636 = vmul.f32 %v593, %v593
    %v637 = vmul.f32 %v598, %v598
    %v638 = vmul.f32 %v603, %v603
    %v639 = vmul.f32 %v608, %v608
    %v640 = vmul.f32 %v613, %v613
    %v641 = vmul.f32 %v618, %v618
    %v642 = vadd.f32 %v634, %v635
    %v643 = vadd.f32 %v642, %v636
    %v644 = vadd.f32 %v643, %v637
    %v645 = vadd.f32 %v644, %v638
    %v646 = vadd.f32 %v645, %v639
    %v647 = vadd.f32 %v646, %v640
    %v648 = vadd.f32 %v647, %v641
    %v649 = vrot.slane %v648, 4
    %v650 = vadd.f32 %v648, %v649
    %v651 = vrot.slane %v650, 2
    %v652 = vadd.f32 %v650, %v651
    %v653 = vrot.slane %v652, 1
    %v654 = vadd.f32 %v652, %v653
    %v655 = vmul.f32 %v633, 0.015625
    %v656 = vmul.f32 %v654, 0.015625
    %v657 = vmul.f32 %v655, %v655
    %v658 = vsub.f32 %v656, %v657
    %v659 = vadd.f32 %v658, 1e-05
    %v660 = vrsqrt.pop %v659
    %v661 = vmul.f32 %v106, %v660
    %v662 = vmul.f32 %v655, %v661
    %v663 = vsub.f32 %v107, %v662
    %v664 = vlaneseq
    %v665 = vshrl.u32 %v664, 7
    %v666 = vsub.s32 2, %v665
    %v667 = vrot.slane %v661, %v666
    %v668 = vmul.f32 %v583, %v667
    %v669 = vmul.f32 %v588, %v667
    %v670 = vmul.f32 %v593, %v667
    %v671 = vmul.f32 %v598, %v667
    %v672 = vmul.f32 %v603, %v667
    %v673 = vmul.f32 %v608, %v667
    %v674 = vmul.f32 %v613, %v667
    %v675 = vmul.f32 %v618, %v667
    %v676 = vlaneseq
    %v677 = vshrl.u32 %v676, 7
    %v678 = vsub.s32 2, %v677
    %v679 = vrot.slane %v663, %v678
    %v680 = vadd.f32 %v668, %v679
    %v681 = vadd.f32 %v669, %v679
    %v682 = vadd.f32 %v670, %v679
    %v683 = vadd.f32 %v671, %v679
    %v684 = vadd.f32 %v672, %v679
    %v685 = vadd.f32 %v673, %v679
    %v686 = vadd.f32 %v674, %v679
    %v687 = vadd.f32 %v675, %v679
    %v688 = vadd.f32 %v296, %v680
    %v689 = vadd.f32 %v297, %v681
    %v690 = vadd.f32 %v298, %v682
    %v691 = vadd.f32 %v299, %v683
    %v692 = vadd.f32 %v300, %v684
    %v693 = vadd.f32 %v301, %v685
    %v694 = vadd.f32 %v302, %v686
    %v695 = vadd.f32 %v303, %v687
    %s696 = scalar_lea.vmem [#allocation5], 128
    %v697 = vld [vmem:[%s696] sm:$0xff]
    %v698 = vld [vmem:[%s696 + $0x8] sm:$0xff]
    %v699 = vld [vmem:[%s696 + $0x10] sm:$0xff]
    %v700 = vld [vmem:[%s696 + $0x18] sm:$0xff]
    %v701 = vld [vmem:[%s696 + $0x20] sm:$0xff]
    %v702 = vld [vmem:[%s696 + $0x28] sm:$0xff]
    %v703 = vld [vmem:[%s696 + $0x30] sm:$0xff]
    %v704 = vld [vmem:[%s696 + $0x38] sm:$0xff]
    %v705 = vld [vmem:[%s696 + $0x40] sm:$0xff]
    %v706 = vld [vmem:[%s696 + $0x48] sm:$0xff]
    %v707 = vld [vmem:[%s696 + $0x50] sm:$0xff]
    %v708 = vld [vmem:[%s696 + $0x58] sm:$0xff]
    %v709 = vld [vmem:[%s696 + $0x60] sm:$0xff]
    %v710 = vld [vmem:[%s696 + $0x68] sm:$0xff]
    %v711 = vld [vmem:[%s696 + $0x70] sm:$0xff]
    %v712 = vld [vmem:[%s696 + $0x78] sm:$0xff]
    %713 = vmatprep.subr.mxu0 0.0
    %714 = vmatpush1.msra.mxu0 %v712
    %715 = vmatprep.subr.mxu0 0.0
    %716 = vmatpush1.msra.mxu0 %v711
    %717 = vmatprep.subr.mxu0 0.0
    %718 = vmatpush1.msra.mxu0 %v710
    %719 = vmatprep.subr.mxu0 0.0
    %720 = vmatpush1.msra.mxu0 %v709
    %721 = vmatprep.subr.mxu0 0.0
    %722 = vmatpush1.msra.mxu0 %v708
    %723 = vmatprep.subr.mxu0 0.0
    %724 = vmatpush1.msra.mxu0 %v707
    %725 = vmatprep.subr.mxu0 0.0
    %726 = vmatpush1.msra.mxu0 %v706
    %727 = vmatprep.subr.mxu0 0.0
    %728 = vmatpush1.msra.mxu0 %v705
    %729 = vmatprep.subr.mxu0 0.0
    %730 = vmatpush1.msra.mxu0 %v704
    %731 = vmatprep.subr.mxu0 0.0
    %732 = vmatpush1.msra.mxu0 %v703
    %733 = vmatprep.subr.mxu0 0.0
    %734 = vmatpush1.msra.mxu0 %v702
    %735 = vmatprep.subr.mxu0 0.0
    %736 = vmatpush1.msra.mxu0 %v701
    %737 = vmatprep.subr.mxu0 0.0
    %738 = vmatpush1.msra.mxu0 %v700
    %739 = vmatprep.subr.mxu0 0.0
    %740 = vmatpush1.msra.mxu0 %v699
    %741 = vmatprep.subr.mxu0 0.0
    %742 = vmatpush1.msra.mxu0 %v698
    %743 = vmatprep.subr.mxu0 0.0
    %744 = vmatpush1.msra.mxu0 %v697
    %745 = vmatprep.subr.mxu0 0.0
    %746 = vmatpush2.msra.mxu0 0.0
    %747 = vmatprep.subr.mxu0 0.0
    %748 = vmatpush2.msra.mxu0 0.0
    %749 = vmatprep.subr.mxu0 0.0
    %750 = vmatpush2.msra.mxu0 0.0
    %751 = vmatprep.subr.mxu0 0.0
    %752 = vmatpush2.msra.mxu0 0.0
    %753 = vmatprep.subr.mxu0 0.0
    %754 = vmatpush2.msra.mxu0 0.0
    %755 = vmatprep.subr.mxu0 0.0
    %756 = vmatpush2.msra.mxu0 0.0
    %757 = vmatprep.subr.mxu0 0.0
    %758 = vmatpush2.msra.mxu0 0.0
    %759 = vmatprep.subr.mxu0 0.0
    %760 = vmatpush2.msra.mxu0 0.0
    %761 = vmatprep.subr.mxu0 0.0
    %762 = vmatpush2.msra.mxu0 0.0
    %763 = vmatprep.subr.mxu0 0.0
    %764 = vmatpush2.msra.mxu0 0.0
    %765 = vmatprep.subr.mxu0 0.0
    %766 = vmatpush2.msra.mxu0 0.0
    %767 = vmatprep.subr.mxu0 0.0
    %768 = vmatpush2.msra.mxu0 0.0
    %769 = vmatprep.subr.mxu0 0.0
    %770 = vmatpush2.msra.mxu0 0.0
    %771 = vmatprep.subr.mxu0 0.0
    %772 = vmatpush2.msra.mxu0 0.0
    %773 = vmatprep.subr.mxu0 0.0
    %774 = vmatpush2.msra.mxu0 0.0
    %775 = vmatprep.subr.mxu0 0.0
    %776 = vmatpush2.msra.mxu0 0.0
    %777 = vmatprep.mubr.f32.mxu0 0.0
    %778 = vmatmul.mubr.f32.gmra.mxu0 %v688
    %v779 = vpop.f32.mrf.mxu0
    %v780 = vadd.f32 0.0, %v779
    %v781 = vpop.f32.mrf.mxu0
    %782 = vmatprep.mubr.f32.mxu0 0.0
    %783 = vmatmul.mubr.f32.gmra.mxu0 %v689
    %v784 = vpop.f32.mrf.mxu0
    %v785 = vadd.f32 0.0, %v784
    %v786 = vpop.f32.mrf.mxu0
    %787 = vmatprep.mubr.f32.mxu0 0.0
    %788 = vmatmul.mubr.f32.gmra.mxu0 %v690
    %v789 = vpop.f32.mrf.mxu0
    %v790 = vadd.f32 0.0, %v789
    %v791 = vpop.f32.mrf.mxu0
    %792 = vmatprep.mubr.f32.mxu0 0.0
    %793 = vmatmul.mubr.f32.gmra.mxu0 %v691
    %v794 = vpop.f32.mrf.mxu0
    %v795 = vadd.f32 0.0, %v794
    %v796 = vpop.f32.mrf.mxu0
    %797 = vmatprep.mubr.f32.mxu0 0.0
    %798 = vmatmul.mubr.f32.gmra.mxu0 %v692
    %v799 = vpop.f32.mrf.mxu0
    %v800 = vadd.f32 0.0, %v799
    %v801 = vpop.f32.mrf.mxu0
    %802 = vmatprep.mubr.f32.mxu0 0.0
    %803 = vmatmul.mubr.f32.gmra.mxu0 %v693
    %v804 = vpop.f32.mrf.mxu0
    %v805 = vadd.f32 0.0, %v804
    %v806 = vpop.f32.mrf.mxu0
    %807 = vmatprep.mubr.f32.mxu0 0.0
    %808 = vmatmul.mubr.f32.gmra.mxu0 %v694
    %v809 = vpop.f32.mrf.mxu0
    %v810 = vadd.f32 0.0, %v809
    %v811 = vpop.f32.mrf.mxu0
    %812 = vmatprep.mubr.f32.mxu0 0.0
    %813 = vmatmul.mubr.f32.gmra.mxu0 %v695
    %v814 = vpop.f32.mrf.mxu0
    %v815 = vadd.f32 0.0, %v814
    %v816 = vpop.f32.mrf.mxu0
    %817 = vdwg.mxu0
    %v818 = vadd.f32 %v780, %v785
    %v819 = vadd.f32 %v818, %v790
    %v820 = vadd.f32 %v819, %v795
    %v821 = vadd.f32 %v820, %v800
    %v822 = vadd.f32 %v821, %v805
    %v823 = vadd.f32 %v822, %v810
    %v824 = vadd.f32 %v823, %v815
    %v825 = vrot.slane %v824, 4
    %v826 = vadd.f32 %v824, %v825
    %v827 = vrot.slane %v826, 2
    %v828 = vadd.f32 %v826, %v827
    %v829 = vrot.slane %v828, 1
    %v830 = vadd.f32 %v828, %v829
    %v831 = vmul.f32 %v780, %v780
    %v832 = vmul.f32 %v785, %v785
    %v833 = vmul.f32 %v790, %v790
    %v834 = vmul.f32 %v795, %v795
    %v835 = vmul.f32 %v800, %v800
    %v836 = vmul.f32 %v805, %v805
    %v837 = vmul.f32 %v810, %v810
    %v838 = vmul.f32 %v815, %v815
    %v839 = vadd.f32 %v831, %v832
    %v840 = vadd.f32 %v839, %v833
    %v841 = vadd.f32 %v840, %v834
    %v842 = vadd.f32 %v841, %v835
    %v843 = vadd.f32 %v842, %v836
    %v844 = vadd.f32 %v843, %v837
    %v845 = vadd.f32 %v844, %v838
    %v846 = vrot.slane %v845, 4
    %v847 = vadd.f32 %v845, %v846
    %v848 = vrot.slane %v847, 2
    %v849 = vadd.f32 %v847, %v848
    %v850 = vrot.slane %v849, 1
    %v851 = vadd.f32 %v849, %v850
    %v852 = vmul.f32 %v830, 0.015625
    %v853 = vmul.f32 %v851, 0.015625
    %v854 = vmul.f32 %v852, %v852
    %v855 = vsub.f32 %v853, %v854
    %v856 = vadd.f32 %v855, 1e-05
    %v857 = vrsqrt.pop %v856
    %v858 = vmul.f32 %v106, %v857
    %v859 = vmul.f32 %v852, %v858
    %v860 = vsub.f32 %v107, %v859
    %v861 = vlaneseq
    %v862 = vshrl.u32 %v861, 7
    %v863 = vsub.s32 3, %v862
    %v864 = vrot.slane %v858, %v863
    %v865 = vmul.f32 %v780, %v864
    %v866 = vmul.f32 %v785, %v864
    %v867 = vmul.f32 %v790, %v864
    %v868 = vmul.f32 %v795, %v864
    %v869 = vmul.f32 %v800, %v864
    %v870 = vmul.f32 %v805, %v864
    %v871 = vmul.f32 %v810, %v864
    %v872 = vmul.f32 %v815, %v864
    %v873 = vlaneseq
    %v874 = vshrl.u32 %v873, 7
    %v875 = vsub.s32 3, %v874
    %v876 = vrot.slane %v860, %v875
    %v877 = vadd.f32 %v865, %v876
    %v878 = vadd.f32 %v866, %v876
    %v879 = vadd.f32 %v867, %v876
    %v880 = vadd.f32 %v868, %v876
    %v881 = vadd.f32 %v869, %v876
    %v882 = vadd.f32 %v870, %v876
    %v883 = vadd.f32 %v871, %v876
    %v884 = vadd.f32 %v872, %v876
    %v885 = vmax.f32 %v877, 0.0
    %v886 = vmax.f32 %v878, 0.0
    %v887 = vmax.f32 %v879, 0.0
    %v888 = vmax.f32 %v880, 0.0
    %v889 = vmax.f32 %v881, 0.0
    %v890 = vmax.f32 %v882, 0.0
    %v891 = vmax.f32 %v883, 0.0
    %v892 = vmax.f32 %v884, 0.0
    %s893 = scalar_lea.vmem [#allocation7], 128
    %v894 = vld [vmem:[%s893] sm:$0xff]
    %v895 = vld [vmem:[%s893 + $0x8] sm:$0xff]
    %v896 = vld [vmem:[%s893 + $0x10] sm:$0xff]
    %v897 = vld [vmem:[%s893 + $0x18] sm:$0xff]
    %v898 = vld [vmem:[%s893 + $0x20] sm:$0xff]
    %v899 = vld [vmem:[%s893 + $0x28] sm:$0xff]
    %v900 = vld [vmem:[%s893 + $0x30] sm:$0xff]
    %v901 = vld [vmem:[%s893 + $0x38] sm:$0xff]
    %v902 = vld [vmem:[%s893 + $0x40] sm:$0xff]
    %v903 = vld [vmem:[%s893 + $0x48] sm:$0xff]
    %v904 = vld [vmem:[%s893 + $0x50] sm:$0xff]
    %v905 = vld [vmem:[%s893 + $0x58] sm:$0xff]
    %v906 = vld [vmem:[%s893 + $0x60] sm:$0xff]
    %v907 = vld [vmem:[%s893 + $0x68] sm:$0xff]
    %v908 = vld [vmem:[%s893 + $0x70] sm:$0xff]
    %v909 = vld [vmem:[%s893 + $0x78] sm:$0xff]
    %910 = vmatprep.subr.mxu0 0.0
    %911 = vmatpush1.msra.mxu0 %v909
    %912 = vmatprep.subr.mxu0 0.0
    %913 = vmatpush1.msra.mxu0 %v908
    %914 = vmatprep.subr.mxu0 0.0
    %915 = vmatpush1.msra.mxu0 %v907
    %916 = vmatprep.subr.mxu0 0.0
    %917 = vmatpush1.msra.mxu0 %v906
    %918 = vmatprep.subr.mxu0 0.0
    %919 = vmatpush1.msra.mxu0 %v905
    %920 = vmatprep.subr.mxu0 0.0
    %921 = vmatpush1.msra.mxu0 %v904
    %922 = vmatprep.subr.mxu0 0.0
    %923 = vmatpush1.msra.mxu0 %v903
    %924 = vmatprep.subr.mxu0 0.0
    %925 = vmatpush1.msra.mxu0 %v902
    %926 = vmatprep.subr.mxu0 0.0
    %927 = vmatpush1.msra.mxu0 %v901
    %928 = vmatprep.subr.mxu0 0.0
    %929 = vmatpush1.msra.mxu0 %v900
    %930 = vmatprep.subr.mxu0 0.0
    %931 = vmatpush1.msra.mxu0 %v899
    %932 = vmatprep.subr.mxu0 0.0
    %933 = vmatpush1.msra.mxu0 %v898
    %934 = vmatprep.subr.mxu0 0.0
    %935 = vmatpush1.msra.mxu0 %v897
    %936 = vmatprep.subr.mxu0 0.0
    %937 = vmatpush1.msra.mxu0 %v896
    %938 = vmatprep.subr.mxu0 0.0
    %939 = vmatpush1.msra.mxu0 %v895
    %940 = vmatprep.subr.mxu0 0.0
    %941 = vmatpush1.msra.mxu0 %v894
    %942 = vmatprep.subr.mxu0 0.0
    %943 = vmatpush2.msra.mxu0 0.0
    %944 = vmatprep.subr.mxu0 0.0
    %945 = vmatpush2.msra.mxu0 0.0
    %946 = vmatprep.subr.mxu0 0.0
    %947 = vmatpush2.msra.mxu0 0.0
    %948 = vmatprep.subr.mxu0 0.0
    %949 = vmatpush2.msra.mxu0 0.0
    %950 = vmatprep.subr.mxu0 0.0
    %951 = vmatpush2.msra.mxu0 0.0
    %952 = vmatprep.subr.mxu0 0.0
    %953 = vmatpush2.msra.mxu0 0.0
    %954 = vmatprep.subr.mxu0 0.0
    %955 = vmatpush2.msra.mxu0 0.0
    %956 = vmatprep.subr.mxu0 0.0
    %957 = vmatpush2.msra.mxu0 0.0
    %958 = vmatprep.subr.mxu0 0.0
    %959 = vmatpush2.msra.mxu0 0.0
    %960 = vmatprep.subr.mxu0 0.0
    %961 = vmatpush2.msra.mxu0 0.0
    %962 = vmatprep.subr.mxu0 0.0
    %963 = vmatpush2.msra.mxu0 0.0
    %964 = vmatprep.subr.mxu0 0.0
    %965 = vmatpush2.msra.mxu0 0.0
    %966 = vmatprep.subr.mxu0 0.0
    %967 = vmatpush2.msra.mxu0 0.0
    %968 = vmatprep.subr.mxu0 0.0
    %969 = vmatpush2.msra.mxu0 0.0
    %970 = vmatprep.subr.mxu0 0.0
    %971 = vmatpush2.msra.mxu0 0.0
    %972 = vmatprep.subr.mxu0 0.0
    %973 = vmatpush2.msra.mxu0 0.0
    %974 = vmatprep.mubr.f32.mxu0 0.0
    %975 = vmatmul.mubr.f32.gmra.mxu0 %v885
    %v976 = vpop.f32.mrf.mxu0
    %v977 = vadd.f32 0.0, %v976
    %v978 = vpop.f32.mrf.mxu0
    %979 = vmatprep.mubr.f32.mxu0 0.0
    %980 = vmatmul.mubr.f32.gmra.mxu0 %v886
    %v981 = vpop.f32.mrf.mxu0
    %v982 = vadd.f32 0.0, %v981
    %v983 = vpop.f32.mrf.mxu0
    %984 = vmatprep.mubr.f32.mxu0 0.0
    %985 = vmatmul.mubr.f32.gmra.mxu0 %v887
    %v986 = vpop.f32.mrf.mxu0
    %v987 = vadd.f32 0.0, %v986
    %v988 = vpop.f32.mrf.mxu0
    %989 = vmatprep.mubr.f32.mxu0 0.0
    %990 = vmatmul.mubr.f32.gmra.mxu0 %v888
    %v991 = vpop.f32.mrf.mxu0
    %v992 = vadd.f32 0.0, %v991
    %v993 = vpop.f32.mrf.mxu0
    %994 = vmatprep.mubr.f32.mxu0 0.0
    %995 = vmatmul.mubr.f32.gmra.mxu0 %v889
    %v996 = vpop.f32.mrf.mxu0
    %v997 = vadd.f32 0.0, %v996
    %v998 = vpop.f32.mrf.mxu0
    %999 = vmatprep.mubr.f32.mxu0 0.0
    %1000 = vmatmul.mubr.f32.gmra.mxu0 %v890
    %v1001 = vpop.f32.mrf.mxu0
    %v1002 = vadd.f32 0.0, %v1001
    %v1003 = vpop.f32.mrf.mxu0
    %1004 = vmatprep.mubr.f32.mxu0 0.0
    %1005 = vmatmul.mubr.f32.gmra.mxu0 %v891
    %v1006 = vpop.f32.mrf.mxu0
    %v1007 = vadd.f32 0.0, %v1006
    %v1008 = vpop.f32.mrf.mxu0
    %1009 = vmatprep.mubr.f32.mxu0 0.0
    %1010 = vmatmul.mubr.f32.gmra.mxu0 %v892
    %v1011 = vpop.f32.mrf.mxu0
    %v1012 = vadd.f32 0.0, %v1011
    %v1013 = vpop.f32.mrf.mxu0
    %1014 = vdwg.mxu0
    %v1015 = vadd.f32 %v977, %v982
    %v1016 = vadd.f32 %v1015, %v987
    %v1017 = vadd.f32 %v1016, %v992
    %v1018 = vadd.f32 %v1017, %v997
    %v1019 = vadd.f32 %v1018, %v1002
    %v1020 = vadd.f32 %v1019, %v1007
    %v1021 = vadd.f32 %v1020, %v1012
    %v1022 = vrot.slane %v1021, 4
    %v1023 = vadd.f32 %v1021, %v1022
    %v1024 = vrot.slane %v1023, 2
    %v1025 = vadd.f32 %v1023, %v1024
    %v1026 = vrot.slane %v1025, 1
    %v1027 = vadd.f32 %v1025, %v1026
    %v1028 = vmul.f32 %v977, %v977
    %v1029 = vmul.f32 %v982, %v982
    %v1030 = vmul.f32 %v987, %v987
    %v1031 = vmul.f32 %v992, %v992
    %v1032 = vmul.f32 %v997, %v997
    %v1033 = vmul.f32 %v1002, %v1002
    %v1034 = vmul.f32 %v1007, %v1007
    %v1035 = vmul.f32 %v1012, %v1012
    %v1036 = vadd.f32 %v1028, %v1029
    %v1037 = vadd.f32 %v1036, %v1030
    %v1038 = vadd.f32 %v1037, %v1031
    %v1039 = vadd.f32 %v1038, %v1032
    %v1040 = vadd.f32 %v1039, %v1033
    %v1041 = vadd.f32 %v1040, %v1034
    %v1042 = vadd.f32 %v1041, %v1035
    %v1043 = vrot.slane %v1042, 4
    %v1044 = vadd.f32 %v1042, %v1043
    %v1045 = vrot.slane %v1044, 2
    %v1046 = vadd.f32 %v1044, %v1045
    %v1047 = vrot.slane %v1046, 1
    %v1048 = vadd.f32 %v1046, %v1047
    %v1049 = vmul.f32 %v1027, 0.015625
    %v1050 = vmul.f32 %v1048, 0.015625
    %v1051 = vmul.f32 %v1049, %v1049
    %v1052 = vsub.f32 %v1050, %v1051
    %v1053 = vadd.f32 %v1052, 1e-05
    %v1054 = vrsqrt.pop %v1053
    %v1055 = vmul.f32 %v106, %v1054
    %v1056 = vmul.f32 %v1049, %v1055
    %v1057 = vsub.f32 %v107, %v1056
    %v1058 = vlaneseq
    %v1059 = vshrl.u32 %v1058, 7
    %v1060 = vsub.s32 4, %v1059
    %v1061 = vrot.slane %v1055, %v1060
    %v1062 = vmul.f32 %v977, %v1061
    %v1063 = vmul.f32 %v982, %v1061
    %v1064 = vmul.f32 %v987, %v1061
    %v1065 = vmul.f32 %v992, %v1061
    %v1066 = vmul.f32 %v997, %v1061
    %v1067 = vmul.f32 %v1002, %v1061
    %v1068 = vmul.f32 %v1007, %v1061
    %v1069 = vmul.f32 %v1012, %v1061
    %v1070 = vlaneseq
    %v1071 = vshrl.u32 %v1070, 7
    %v1072 = vsub.s32 4, %v1071
    %v1073 = vrot.slane %v1057, %v1072
    %v1074 = vadd.f32 %v1062, %v1073
    %v1075 = vadd.f32 %v1063, %v1073
    %v1076 = vadd.f32 %v1064, %v1073
    %v1077 = vadd.f32 %v1065, %v1073
    %v1078 = vadd.f32 %v1066, %v1073
    %v1079 = vadd.f32 %v1067, %v1073
    %v1080 = vadd.f32 %v1068, %v1073
    %v1081 = vadd.f32 %v1069, %v1073
    %v1082 = vadd.f32 %v688, %v1074
    %v1083 = vadd.f32 %v689, %v1075
    %v1084 = vadd.f32 %v690, %v1076
    %v1085 = vadd.f32 %v691, %v1077
    %v1086 = vadd.f32 %v692, %v1078
    %v1087 = vadd.f32 %v693, %v1079
    %v1088 = vadd.f32 %v694, %v1080
    %v1089 = vadd.f32 %v695, %v1081
    %s1090 = scalar_lea.vmem [#allocation5], 256
    %v1091 = vld [vmem:[%s1090] sm:$0xff]
    %v1092 = vld [vmem:[%s1090 + $0x8] sm:$0xff]
    %v1093 = vld [vmem:[%s1090 + $0x10] sm:$0xff]
    %v1094 = vld [vmem:[%s1090 + $0x18] sm:$0xff]
    %v1095 = vld [vmem:[%s1090 + $0x20] sm:$0xff]
    %v1096 = vld [vmem:[%s1090 + $0x28] sm:$0xff]
    %v1097 = vld [vmem:[%s1090 + $0x30] sm:$0xff]
    %v1098 = vld [vmem:[%s1090 + $0x38] sm:$0xff]
    %v1099 = vld [vmem:[%s1090 + $0x40] sm:$0xff]
    %v1100 = vld [vmem:[%s1090 + $0x48] sm:$0xff]
    %v1101 = vld [vmem:[%s1090 + $0x50] sm:$0xff]
    %v1102 = vld [vmem:[%s1090 + $0x58] sm:$0xff]
    %v1103 = vld [vmem:[%s1090 + $0x60] sm:$0xff]
    %v1104 = vld [vmem:[%s1090 + $0x68] sm:$0xff]
    %v1105 = vld [vmem:[%s1090 + $0x70] sm:$0xff]
    %v1106 = vld [vmem:[%s1090 + $0x78] sm:$0xff]
    %1107 = vmatprep.subr.mxu0 0.0
    %1108 = vmatpush1.msra.mxu0 %v1106
    %1109 = vmatprep.subr.mxu0 0.0
    %1110 = vmatpush1.msra.mxu0 %v1105
    %1111 = vmatprep.subr.mxu0 0.0
    %1112 = vmatpush1.msra.mxu0 %v1104
    %1113 = vmatprep.subr.mxu0 0.0
    %1114 = vmatpush1.msra.mxu0 %v1103
    %1115 = vmatprep.subr.mxu0 0.0
    %1116 = vmatpush1.msra.mxu0 %v1102
    %1117 = vmatprep.subr.mxu0 0.0
    %1118 = vmatpush1.msra.mxu0 %v1101
    %1119 = vmatprep.subr.mxu0 0.0
    %1120 = vmatpush1.msra.mxu0 %v1100
    %1121 = vmatprep.subr.mxu0 0.0
    %1122 = vmatpush1.msra.mxu0 %v1099
    %1123 = vmatprep.subr.mxu0 0.0
    %1124 = vmatpush1.msra.mxu0 %v1098
    %1125 = vmatprep.subr.mxu0 0.0
    %1126 = vmatpush1.msra.mxu0 %v1097
    %1127 = vmatprep.subr.mxu0 0.0
    %1128 = vmatpush1.msra.mxu0 %v1096
    %1129 = vmatprep.subr.mxu0 0.0
    %1130 = vmatpush1.msra.mxu0 %v1095
    %1131 = vmatprep.subr.mxu0 0.0
    %1132 = vmatpush1.msra.mxu0 %v1094
    %1133 = vmatprep.subr.mxu0 0.0
    %1134 = vmatpush1.msra.mxu0 %v1093
    %1135 = vmatprep.subr.mxu0 0.0
    %1136 = vmatpush1.msra.mxu0 %v1092
    %1137 = vmatprep.subr.mxu0 0.0
    %1138 = vmatpush1.msra.mxu0 %v1091
    %1139 = vmatprep.subr.mxu0 0.0
    %1140 = vmatpush2.msra.mxu0 0.0
    %1141 = vmatprep.subr.mxu0 0.0
    %1142 = vmatpush2.msra.mxu0 0.0
    %1143 = vmatprep.subr.mxu0 0.0
    %1144 = vmatpush2.msra.mxu0 0.0
    %1145 = vmatprep.subr.mxu0 0.0
    %1146 = vmatpush2.msra.mxu0 0.0
    %1147 = vmatprep.subr.mxu0 0.0
    %1148 = vmatpush2.msra.mxu0 0.0
    %1149 = vmatprep.subr.mxu0 0.0
    %1150 = vmatpush2.msra.mxu0 0.0
    %1151 = vmatprep.subr.mxu0 0.0
    %1152 = vmatpush2.msra.mxu0 0.0
    %1153 = vmatprep.subr.mxu0 0.0
    %1154 = vmatpush2.msra.mxu0 0.0
    %1155 = vmatprep.subr.mxu0 0.0
    %1156 = vmatpush2.msra.mxu0 0.0
    %1157 = vmatprep.subr.mxu0 0.0
    %1158 = vmatpush2.msra.mxu0 0.0
    %1159 = vmatprep.subr.mxu0 0.0
    %1160 = vmatpush2.msra.mxu0 0.0
    %1161 = vmatprep.subr.mxu0 0.0
    %1162 = vmatpush2.msra.mxu0 0.0
    %1163 = vmatprep.subr.mxu0 0.0
    %1164 = vmatpush2.msra.mxu0 0.0
    %1165 = vmatprep.subr.mxu0 0.0
    %1166 = vmatpush2.msra.mxu0 0.0
    %1167 = vmatprep.subr.mxu0 0.0
    %1168 = vmatpush2.msra.mxu0 0.0
    %1169 = vmatprep.subr.mxu0 0.0
    %1170 = vmatpush2.msra.mxu0 0.0
    %1171 = vmatprep.mubr.f32.mxu0 0.0
    %1172 = vmatmul.mubr.f32.gmra.mxu0 %v1082
    %v1173 = vpop.f32.mrf.mxu0
    %v1174 = vadd.f32 0.0, %v1173
    %v1175 = vpop.f32.mrf.mxu0
    %1176 = vmatprep.mubr.f32.mxu0 0.0
    %1177 = vmatmul.mubr.f32.gmra.mxu0 %v1083
    %v1178 = vpop.f32.mrf.mxu0
    %v1179 = vadd.f32 0.0, %v1178
    %v1180 = vpop.f32.mrf.mxu0
    %1181 = vmatprep.mubr.f32.mxu0 0.0
    %1182 = vmatmul.mubr.f32.gmra.mxu0 %v1084
    %v1183 = vpop.f32.mrf.mxu0
    %v1184 = vadd.f32 0.0, %v1183
    %v1185 = vpop.f32.mrf.mxu0
    %1186 = vmatprep.mubr.f32.mxu0 0.0
    %1187 = vmatmul.mubr.f32.gmra.mxu0 %v1085
    %v1188 = vpop.f32.mrf.mxu0
    %v1189 = vadd.f32 0.0, %v1188
    %v1190 = vpop.f32.mrf.mxu0
    %1191 = vmatprep.mubr.f32.mxu0 0.0
    %1192 = vmatmul.mubr.f32.gmra.mxu0 %v1086
    %v1193 = vpop.f32.mrf.mxu0
    %v1194 = vadd.f32 0.0, %v1193
    %v1195 = vpop.f32.mrf.mxu0
    %1196 = vmatprep.mubr.f32.mxu0 0.0
    %1197 = vmatmul.mubr.f32.gmra.mxu0 %v1087
    %v1198 = vpop.f32.mrf.mxu0
    %v1199 = vadd.f32 0.0, %v1198
    %v1200 = vpop.f32.mrf.mxu0
    %1201 = vmatprep.mubr.f32.mxu0 0.0
    %1202 = vmatmul.mubr.f32.gmra.mxu0 %v1088
    %v1203 = vpop.f32.mrf.mxu0
    %v1204 = vadd.f32 0.0, %v1203
    %v1205 = vpop.f32.mrf.mxu0
    %1206 = vmatprep.mubr.f32.mxu0 0.0
    %1207 = vmatmul.mubr.f32.gmra.mxu0 %v1089
    %v1208 = vpop.f32.mrf.mxu0
    %v1209 = vadd.f32 0.0, %v1208
    %v1210 = vpop.f32.mrf.mxu0
    %1211 = vdwg.mxu0
    %v1212 = vadd.f32 %v1174, %v1179
    %v1213 = vadd.f32 %v1212, %v1184
    %v1214 = vadd.f32 %v1213, %v1189
    %v1215 = vadd.f32 %v1214, %v1194
    %v1216 = vadd.f32 %v1215, %v1199
    %v1217 = vadd.f32 %v1216, %v1204
    %v1218 = vadd.f32 %v1217, %v1209
    %v1219 = vrot.slane %v1218, 4
    %v1220 = vadd.f32 %v1218, %v1219
    %v1221 = vrot.slane %v1220, 2
    %v1222 = vadd.f32 %v1220, %v1221
    %v1223 = vrot.slane %v1222, 1
    %v1224 = vadd.f32 %v1222, %v1223
    %v1225 = vmul.f32 %v1174, %v1174
    %v1226 = vmul.f32 %v1179, %v1179
    %v1227 = vmul.f32 %v1184, %v1184
    %v1228 = vmul.f32 %v1189, %v1189
    %v1229 = vmul.f32 %v1194, %v1194
    %v1230 = vmul.f32 %v1199, %v1199
    %v1231 = vmul.f32 %v1204, %v1204
    %v1232 = vmul.f32 %v1209, %v1209
    %v1233 = vadd.f32 %v1225, %v1226
    %v1234 = vadd.f32 %v1233, %v1227
    %v1235 = vadd.f32 %v1234, %v1228
    %v1236 = vadd.f32 %v1235, %v1229
    %v1237 = vadd.f32 %v1236, %v1230
    %v1238 = vadd.f32 %v1237, %v1231
    %v1239 = vadd.f32 %v1238, %v1232
    %v1240 = vrot.slane %v1239, 4
    %v1241 = vadd.f32 %v1239, %v1240
    %v1242 = vrot.slane %v1241, 2
    %v1243 = vadd.f32 %v1241, %v1242
    %v1244 = vrot.slane %v1243, 1
    %v1245 = vadd.f32 %v1243, %v1244
    %v1246 = vmul.f32 %v1224, 0.015625
    %v1247 = vmul.f32 %v1245, 0.015625
    %v1248 = vmul.f32 %v1246, %v1246
    %v1249 = vsub.f32 %v1247, %v1248
    %v1250 = vadd.f32 %v1249, 1e-05
    %v1251 = vrsqrt.pop %v1250
    %v1252 = vmul.f32 %v106, %v1251
    %v1253 = vmul.f32 %v1246, %v1252
    %v1254 = vsub.f32 %v107, %v1253
    %v1255 = vlaneseq
    %v1256 = vshrl.u32 %v1255, 7
    %v1257 = vsub.s32 5, %v1256
    %v1258 = vrot.slane %v1252, %v1257
    %v1259 = vmul.f32 %v1174, %v1258
    %v1260 = vmul.f32 %v1179, %v1258
    %v1261 = vmul.f32 %v1184, %v1258
    %v1262 = vmul.f32 %v1189, %v1258
    %v1263 = vmul.f32 %v1194, %v1258
    %v1264 = vmul.f32 %v1199, %v1258
    %v1265 = vmul.f32 %v1204, %v1258
    %v1266 = vmul.f32 %v1209, %v1258
    %v1267 = vlaneseq
    %v1268 = vshrl.u32 %v1267, 7
    %v1269 = vsub.s32 5, %v1268
    %v1270 = vrot.slane %v1254, %v1269
    %v1271 = vadd.f32 %v1259, %v1270
    %v1272 = vadd.f32 %v1260, %v1270
    %v1273 = vadd.f32 %v1261, %v1270
    %v1274 = vadd.f32 %v1262, %v1270
    %v1275 = vadd.f32 %v1263, %v1270
    %v1276 = vadd.f32 %v1264, %v1270
    %v1277 = vadd.f32 %v1265, %v1270
    %v1278 = vadd.f32 %v1266, %v1270
    %v1279 = vmax.f32 %v1271, 0.0
    %v1280 = vmax.f32 %v1272, 0.0
    %v1281 = vmax.f32 %v1273, 0.0
    %v1282 = vmax.f32 %v1274, 0.0
    %v1283 = vmax.f32 %v1275, 0.0
    %v1284 = vmax.f32 %v1276, 0.0
    %v1285 = vmax.f32 %v1277, 0.0
    %v1286 = vmax.f32 %v1278, 0.0
    %s1287 = scalar_lea.vmem [#allocation7], 256
    %v1288 = vld [vmem:[%s1287] sm:$0xff]
    %v1289 = vld [vmem:[%s1287 + $0x8] sm:$0xff]
    %v1290 = vld [vmem:[%s1287 + $0x10] sm:$0xff]
    %v1291 = vld [vmem:[%s1287 + $0x18] sm:$0xff]
    %v1292 = vld [vmem:[%s1287 + $0x20] sm:$0xff]
    %v1293 = vld [vmem:[%s1287 + $0x28] sm:$0xff]
    %v1294 = vld [vmem:[%s1287 + $0x30] sm:$0xff]
    %v1295 = vld [vmem:[%s1287 + $0x38] sm:$0xff]
    %v1296 = vld [vmem:[%s1287 + $0x40] sm:$0xff]
    %v1297 = vld [vmem:[%s1287 + $0x48] sm:$0xff]
    %v1298 = vld [vmem:[%s1287 + $0x50] sm:$0xff]
    %v1299 = vld [vmem:[%s1287 + $0x58] sm:$0xff]
    %v1300 = vld [vmem:[%s1287 + $0x60] sm:$0xff]
    %v1301 = vld [vmem:[%s1287 + $0x68] sm:$0xff]
    %v1302 = vld [vmem:[%s1287 + $0x70] sm:$0xff]
    %v1303 = vld [vmem:[%s1287 + $0x78] sm:$0xff]
    %1304 = vmatprep.subr.mxu0 0.0
    %1305 = vmatpush1.msra.mxu0 %v1303
    %1306 = vmatprep.subr.mxu0 0.0
    %1307 = vmatpush1.msra.mxu0 %v1302
    %1308 = vmatprep.subr.mxu0 0.0
    %1309 = vmatpush1.msra.mxu0 %v1301
    %1310 = vmatprep.subr.mxu0 0.0
    %1311 = vmatpush1.msra.mxu0 %v1300
    %1312 = vmatprep.subr.mxu0 0.0
    %1313 = vmatpush1.msra.mxu0 %v1299
    %1314 = vmatprep.subr.mxu0 0.0
    %1315 = vmatpush1.msra.mxu0 %v1298
    %1316 = vmatprep.subr.mxu0 0.0
    %1317 = vmatpush1.msra.mxu0 %v1297
    %1318 = vmatprep.subr.mxu0 0.0
    %1319 = vmatpush1.msra.mxu0 %v1296
    %1320 = vmatprep.subr.mxu0 0.0
    %1321 = vmatpush1.msra.mxu0 %v1295
    %1322 = vmatprep.subr.mxu0 0.0
    %1323 = vmatpush1.msra.mxu0 %v1294
    %1324 = vmatprep.subr.mxu0 0.0
    %1325 = vmatpush1.msra.mxu0 %v1293
    %1326 = vmatprep.subr.mxu0 0.0
    %1327 = vmatpush1.msra.mxu0 %v1292
    %1328 = vmatprep.subr.mxu0 0.0
    %1329 = vmatpush1.msra.mxu0 %v1291
    %1330 = vmatprep.subr.mxu0 0.0
    %1331 = vmatpush1.msra.mxu0 %v1290
    %1332 = vmatprep.subr.mxu0 0.0
    %1333 = vmatpush1.msra.mxu0 %v1289
    %1334 = vmatprep.subr.mxu0 0.0
    %1335 = vmatpush1.msra.mxu0 %v1288
    %1336 = vmatprep.subr.mxu0 0.0
    %1337 = vmatpush2.msra.mxu0 0.0
    %1338 = vmatprep.subr.mxu0 0.0
    %1339 = vmatpush2.msra.mxu0 0.0
    %1340 = vmatprep.subr.mxu0 0.0
    %1341 = vmatpush2.msra.mxu0 0.0
    %1342 = vmatprep.subr.mxu0 0.0
    %1343 = vmatpush2.msra.mxu0 0.0
    %1344 = vmatprep.subr.mxu0 0.0
    %1345 = vmatpush2.msra.mxu0 0.0
    %1346 = vmatprep.subr.mxu0 0.0
    %1347 = vmatpush2.msra.mxu0 0.0
    %1348 = vmatprep.subr.mxu0 0.0
    %1349 = vmatpush2.msra.mxu0 0.0
    %1350 = vmatprep.subr.mxu0 0.0
    %1351 = vmatpush2.msra.mxu0 0.0
    %1352 = vmatprep.subr.mxu0 0.0
    %1353 = vmatpush2.msra.mxu0 0.0
    %1354 = vmatprep.subr.mxu0 0.0
    %1355 = vmatpush2.msra.mxu0 0.0
    %1356 = vmatprep.subr.mxu0 0.0
    %1357 = vmatpush2.msra.mxu0 0.0
    %1358 = vmatprep.subr.mxu0 0.0
    %1359 = vmatpush2.msra.mxu0 0.0
    %1360 = vmatprep.subr.mxu0 0.0
    %1361 = vmatpush2.msra.mxu0 0.0
    %1362 = vmatprep.subr.mxu0 0.0
    %1363 = vmatpush2.msra.mxu0 0.0
    %1364 = vmatprep.subr.mxu0 0.0
    %1365 = vmatpush2.msra.mxu0 0.0
    %1366 = vmatprep.subr.mxu0 0.0
    %1367 = vmatpush2.msra.mxu0 0.0
    %1368 = vmatprep.mubr.f32.mxu0 0.0
    %1369 = vmatmul.mubr.f32.gmra.mxu0 %v1279
    %v1370 = vpop.f32.mrf.mxu0
    %v1371 = vadd.f32 0.0, %v1370
    %v1372 = vpop.f32.mrf.mxu0
    %1373 = vmatprep.mubr.f32.mxu0 0.0
    %1374 = vmatmul.mubr.f32.gmra.mxu0 %v1280
    %v1375 = vpop.f32.mrf.mxu0
    %v1376 = vadd.f32 0.0, %v1375
    %v1377 = vpop.f32.mrf.mxu0
    %1378 = vmatprep.mubr.f32.mxu0 0.0
    %1379 = vmatmul.mubr.f32.gmra.mxu0 %v1281
    %v1380 = vpop.f32.mrf.mxu0
    %v1381 = vadd.f32 0.0, %v1380
    %v1382 = vpop.f32.mrf.mxu0
    %1383 = vmatprep.mubr.f32.mxu0 0.0
    %1384 = vmatmul.mubr.f32.gmra.mxu0 %v1282
    %v1385 = vpop.f32.mrf.mxu0
    %v1386 = vadd.f32 0.0, %v1385
    %v1387 = vpop.f32.mrf.mxu0
    %1388 = vmatprep.mubr.f32.mxu0 0.0
    %1389 = vmatmul.mubr.f32.gmra.mxu0 %v1283
    %v1390 = vpop.f32.mrf.mxu0
    %v1391 = vadd.f32 0.0, %v1390
    %v1392 = vpop.f32.mrf.mxu0
    %1393 = vmatprep.mubr.f32.mxu0 0.0
    %1394 = vmatmul.mubr.f32.gmra.mxu0 %v1284
    %v1395 = vpop.f32.mrf.mxu0
    %v1396 = vadd.f32 0.0, %v1395
    %v1397 = vpop.f32.mrf.mxu0
    %1398 = vmatprep.mubr.f32.mxu0 0.0
    %1399 = vmatmul.mubr.f32.gmra.mxu0 %v1285
    %v1400 = vpop.f32.mrf.mxu0
    %v1401 = vadd.f32 0.0, %v1400
    %v1402 = vpop.f32.mrf.mxu0
    %1403 = vmatprep.mubr.f32.mxu0 0.0
    %1404 = vmatmul.mubr.f32.gmra.mxu0 %v1286
    %v1405 = vpop.f32.mrf.mxu0
    %v1406 = vadd.f32 0.0, %v1405
    %v1407 = vpop.f32.mrf.mxu0
    %1408 = vdwg.mxu0
    %v1409 = vadd.f32 %v1371, %v1376
    %v1410 = vadd.f32 %v1409, %v1381
    %v1411 = vadd.f32 %v1410, %v1386
    %v1412 = vadd.f32 %v1411, %v1391
    %v1413 = vadd.f32 %v1412, %v1396
    %v1414 = vadd.f32 %v1413, %v1401
    %v1415 = vadd.f32 %v1414, %v1406
    %v1416 = vrot.slane %v1415, 4
    %v1417 = vadd.f32 %v1415, %v1416
    %v1418 = vrot.slane %v1417, 2
    %v1419 = vadd.f32 %v1417, %v1418
    %v1420 = vrot.slane %v1419, 1
    %v1421 = vadd.f32 %v1419, %v1420
    %v1422 = vmul.f32 %v1371, %v1371
    %v1423 = vmul.f32 %v1376, %v1376
    %v1424 = vmul.f32 %v1381, %v1381
    %v1425 = vmul.f32 %v1386, %v1386
    %v1426 = vmul.f32 %v1391, %v1391
    %v1427 = vmul.f32 %v1396, %v1396
    %v1428 = vmul.f32 %v1401, %v1401
    %v1429 = vmul.f32 %v1406, %v1406
    %v1430 = vadd.f32 %v1422, %v1423
    %v1431 = vadd.f32 %v1430, %v1424
    %v1432 = vadd.f32 %v1431, %v1425
    %v1433 = vadd.f32 %v1432, %v1426
    %v1434 = vadd.f32 %v1433, %v1427
    %v1435 = vadd.f32 %v1434, %v1428
    %v1436 = vadd.f32 %v1435, %v1429
    %v1437 = vrot.slane %v1436, 4
    %v1438 = vadd.f32 %v1436, %v1437
    %v1439 = vrot.slane %v1438, 2
    %v1440 = vadd.f32 %v1438, %v1439
    %v1441 = vrot.slane %v1440, 1
    %v1442 = vadd.f32 %v1440, %v1441
    %v1443 = vmul.f32 %v1421, 0.015625
    %v1444 = vmul.f32 %v1442, 0.015625
    %v1445 = vmul.f32 %v1443, %v1443
    %v1446 = vsub.f32 %v1444, %v1445
    %v1447 = vadd.f32 %v1446, 1e-05
    %v1448 = vrsqrt.pop %v1447
    %v1449 = vmul.f32 %v106, %v1448
    %v1450 = vmul.f32 %v1443, %v1449
    %v1451 = vsub.f32 %v107, %v1450
    %v1452 = vlaneseq
    %v1453 = vshrl.u32 %v1452, 7
    %v1454 = vsub.s32 6, %v1453
    %v1455 = vrot.slane %v1449, %v1454
    %v1456 = vmul.f32 %v1371, %v1455
    %v1457 = vmul.f32 %v1376, %v1455
    %v1458 = vmul.f32 %v1381, %v1455
    %v1459 = vmul.f32 %v1386, %v1455
    %v1460 = vmul.f32 %v1391, %v1455
    %v1461 = vmul.f32 %v1396, %v1455
    %v1462 = vmul.f32 %v1401, %v1455
    %v1463 = vmul.f32 %v1406, %v1455
    %v1464 = vlaneseq
    %v1465 = vshrl.u32 %v1464, 7
    %v1466 = vsub.s32 6, %v1465
    %v1467 = vrot.slane %v1451, %v1466
    %v1468 = vadd.f32 %v1456, %v1467
    %v1469 = vadd.f32 %v1457, %v1467
    %v1470 = vadd.f32 %v1458, %v1467
    %v1471 = vadd.f32 %v1459, %v1467
    %v1472 = vadd.f32 %v1460, %v1467
    %v1473 = vadd.f32 %v1461, %v1467
    %v1474 = vadd.f32 %v1462, %v1467
    %v1475 = vadd.f32 %v1463, %v1467
    %v1476 = vadd.f32 %v1082, %v1468
    %v1477 = vadd.f32 %v1083, %v1469
    %v1478 = vadd.f32 %v1084, %v1470
    %v1479 = vadd.f32 %v1085, %v1471
    %v1480 = vadd.f32 %v1086, %v1472
    %v1481 = vadd.f32 %v1087, %v1473
    %v1482 = vadd.f32 %v1088, %v1474
    %v1483 = vadd.f32 %v1089, %v1475
    %v1484 = vld [vmem:[#allocation8] sm:$0xff]
    %v1485 = vld [vmem:[#allocation8 + $0x8] sm:$0xff]
    %v1486 = vld [vmem:[#allocation8 + $0x10] sm:$0xff]
    %v1487 = vld [vmem:[#allocation8 + $0x18] sm:$0xff]
    %v1488 = vld [vmem:[#allocation8 + $0x20] sm:$0xff]
    %v1489 = vld [vmem:[#allocation8 + $0x28] sm:$0xff]
    %v1490 = vld [vmem:[#allocation8 + $0x30] sm:$0xff]
    %v1491 = vld [vmem:[#allocation8 + $0x38] sm:$0xff]
    %v1492 = vld [vmem:[#allocation8 + $0x40] sm:$0xff]
    %v1493 = vld [vmem:[#allocation8 + $0x48] sm:$0xff]
    %v1494 = vld [vmem:[#allocation8 + $0x50] sm:$0xff]
    %v1495 = vld [vmem:[#allocation8 + $0x58] sm:$0xff]
    %v1496 = vld [vmem:[#allocation8 + $0x60] sm:$0xff]
    %v1497 = vld [vmem:[#allocation8 + $0x68] sm:$0xff]
    %v1498 = vld [vmem:[#allocation8 + $0x70] sm:$0xff]
    %v1499 = vld [vmem:[#allocation8 + $0x78] sm:$0xff]
    %v1500 = vld [vmem:[%s6] sm:$0x1]
    %v1502 = vlaneseq
    %v1503 = vshrl.u32 %v1502, 7
    %v1504 = vsub.s32 0, %v1503
    %v1505 = vrot.slane %v1500, %v1504
    %1507 = vmatprep.subr.mxu0 0.0
    %1508 = vmatpush1.msra.mxu0 %v1499
    %1509 = vmatprep.subr.mxu0 0.0
    %1510 = vmatpush1.msra.mxu0 %v1498
    %1511 = vmatprep.subr.mxu0 0.0
    %1512 = vmatpush1.msra.mxu0 %v1497
    %1513 = vmatprep.subr.mxu0 0.0
    %1514 = vmatpush1.msra.mxu0 %v1496
    %1515 = vmatprep.subr.mxu0 0.0
    %1516 = vmatpush1.msra.mxu0 %v1495
    %1517 = vmatprep.subr.mxu0 0.0
    %1518 = vmatpush1.msra.mxu0 %v1494
    %1519 = vmatprep.subr.mxu0 0.0
    %1520 = vmatpush1.msra.mxu0 %v1493
    %1521 = vmatprep.subr.mxu0 0.0
    %1522 = vmatpush1.msra.mxu0 %v1492
    %1523 = vmatprep.subr.mxu0 0.0
    %1524 = vmatpush1.msra.mxu0 %v1491
    %1525 = vmatprep.subr.mxu0 0.0
    %1526 = vmatpush1.msra.mxu0 %v1490
    %1527 = vmatprep.subr.mxu0 0.0
    %1528 = vmatpush1.msra.mxu0 %v1489
    %1529 = vmatprep.subr.mxu0 0.0
    %1530 = vmatpush1.msra.mxu0 %v1488
    %1531 = vmatprep.subr.mxu0 0.0
    %1532 = vmatpush1.msra.mxu0 %v1487
    %1533 = vmatprep.subr.mxu0 0.0
    %1534 = vmatpush1.msra.mxu0 %v1486
    %1535 = vmatprep.subr.mxu0 0.0
    %1536 = vmatpush1.msra.mxu0 %v1485
    %1537 = vmatprep.subr.mxu0 0.0
    %1538 = vmatpush1.msra.mxu0 %v1484
    %1539 = vmatprep.subr.mxu0 0.0
    %1540 = vmatpush2.msra.mxu0 0.0
    %1541 = vmatprep.subr.mxu0 0.0
    %1542 = vmatpush2.msra.mxu0 0.0
    %1543 = vmatprep.subr.mxu0 0.0
    %1544 = vmatpush2.msra.mxu0 0.0
    %1545 = vmatprep.subr.mxu0 0.0
    %1546 = vmatpush2.msra.mxu0 0.0
    %1547 = vmatprep.subr.mxu0 0.0
    %1548 = vmatpush2.msra.mxu0 0.0
    %1549 = vmatprep.subr.mxu0 0.0
    %1550 = vmatpush2.msra.mxu0 0.0
    %1551 = vmatprep.subr.mxu0 0.0
    %1552 = vmatpush2.msra.mxu0 0.0
    %1553 = vmatprep.subr.mxu0 0.0
    %1554 = vmatpush2.msra.mxu0 0.0
    %1555 = vmatprep.subr.mxu0 0.0
    %1556 = vmatpush2.msra.mxu0 0.0
    %1557 = vmatprep.subr.mxu0 0.0
    %1558 = vmatpush2.msra.mxu0 0.0
    %1559 = vmatprep.subr.mxu0 0.0
    %1560 = vmatpush2.msra.mxu0 0.0
    %1561 = vmatprep.subr.mxu0 0.0
    %1562 = vmatpush2.msra.mxu0 0.0
    %1563 = vmatprep.subr.mxu0 0.0
    %1564 = vmatpush2.msra.mxu0 0.0
    %1565 = vmatprep.subr.mxu0 0.0
    %1566 = vmatpush2.msra.mxu0 0.0
    %1567 = vmatprep.subr.mxu0 0.0
    %1568 = vmatpush2.msra.mxu0 0.0
    %1569 = vmatprep.subr.mxu0 0.0
    %1570 = vmatpush2.msra.mxu0 0.0
    %1571 = vmatprep.mubr.f32.mxu0 0.0
    %1572 = vmatmul.mubr.f32.gmra.mxu0 %v1476
    %v1573 = vpop.f32.mrf.mxu0
    %v1574 = vadd.f32 %v1505, %v1573
    %v1575 = vpop.f32.mrf.mxu0
    %1576 = vmatprep.mubr.f32.mxu0 0.0
    %1577 = vmatmul.mubr.f32.gmra.mxu0 %v1477
    %v1578 = vpop.f32.mrf.mxu0
    %v1579 = vadd.f32 %v1505, %v1578
    %v1580 = vpop.f32.mrf.mxu0
    %1581 = vmatprep.mubr.f32.mxu0 0.0
    %1582 = vmatmul.mubr.f32.gmra.mxu0 %v1478
    %v1583 = vpop.f32.mrf.mxu0
    %v1584 = vadd.f32 %v1505, %v1583
    %v1585 = vpop.f32.mrf.mxu0
    %1586 = vmatprep.mubr.f32.mxu0 0.0
    %1587 = vmatmul.mubr.f32.gmra.mxu0 %v1479
    %v1588 = vpop.f32.mrf.mxu0
    %v1589 = vadd.f32 %v1505, %v1588
    %v1590 = vpop.f32.mrf.mxu0
    %1591 = vmatprep.mubr.f32.mxu0 0.0
    %1592 = vmatmul.mubr.f32.gmra.mxu0 %v1480
    %v1593 = vpop.f32.mrf.mxu0
    %v1594 = vadd.f32 %v1505, %v1593
    %v1595 = vpop.f32.mrf.mxu0
    %1596 = vmatprep.mubr.f32.mxu0 0.0
    %1597 = vmatmul.mubr.f32.gmra.mxu0 %v1481
    %v1598 = vpop.f32.mrf.mxu0
    %v1599 = vadd.f32 %v1505, %v1598
    %v1600 = vpop.f32.mrf.mxu0
    %1601 = vmatprep.mubr.f32.mxu0 0.0
    %1602 = vmatmul.mubr.f32.gmra.mxu0 %v1482
    %v1603 = vpop.f32.mrf.mxu0
    %v1604 = vadd.f32 %v1505, %v1603
    %v1605 = vpop.f32.mrf.mxu0
    %1606 = vmatprep.mubr.f32.mxu0 0.0
    %1607 = vmatmul.mubr.f32.gmra.mxu0 %v1483
    %v1608 = vpop.f32.mrf.mxu0
    %v1609 = vadd.f32 %v1505, %v1608
    %v1610 = vpop.f32.mrf.mxu0
    %1611 = vdwg.mxu0
    %v1612 = vld [vmem:[%s1] sm:$0xff]
    %v1613 = vld [vmem:[%s1 + $0x8] sm:$0xff]
    %v1614 = vld [vmem:[%s1 + $0x10] sm:$0xff]
    %v1615 = vld [vmem:[%s1 + $0x18] sm:$0xff]
    %v1616 = vld [vmem:[%s1 + $0x20] sm:$0xff]
    %v1617 = vld [vmem:[%s1 + $0x28] sm:$0xff]
    %v1618 = vld [vmem:[%s1 + $0x30] sm:$0xff]
    %v1619 = vld [vmem:[%s1 + $0x38] sm:$0xff]
    %v1620 = vrcp.pop %v1612
    %v1621 = vmul.f32 1.0, %v1620
    %v1622 = vrcp.pop %v1613
    %v1623 = vmul.f32 1.0, %v1622
    %v1624 = vrcp.pop %v1614
    %v1625 = vmul.f32 1.0, %v1624
    %v1626 = vrcp.pop %v1615
    %v1627 = vmul.f32 1.0, %v1626
    %v1628 = vrcp.pop %v1616
    %v1629 = vmul.f32 1.0, %v1628
    %v1630 = vrcp.pop %v1617
    %v1631 = vmul.f32 1.0, %v1630
    %v1632 = vrcp.pop %v1618
    %v1633 = vmul.f32 1.0, %v1632
    %v1634 = vrcp.pop %v1619
    %v1635 = vmul.f32 1.0, %v1634
    %1637 = vset.pattern.permute.xlu0 0
    %1638 = vperm.xlu0 %1637, %v1621
    %v1639 = vpop.permute.xlu0 %1638
    %1642 = vset.pattern.permute.xlu0 0
    %1643 = vperm.xlu0 %1642, %v1623
    %v1644 = vpop.permute.xlu0 %1643
    %1647 = vset.pattern.permute.xlu0 0
    %1648 = vperm.xlu0 %1647, %v1625
    %v1649 = vpop.permute.xlu0 %1648
    %1652 = vset.pattern.permute.xlu0 0
    %1653 = vperm.xlu0 %1652, %v1627
    %v1654 = vpop.permute.xlu0 %1653
    %1657 = vset.pattern.permute.xlu0 0
    %1658 = vperm.xlu0 %1657, %v1629
    %v1659 = vpop.permute.xlu0 %1658
    %1662 = vset.pattern.permute.xlu0 0
    %1663 = vperm.xlu0 %1662, %v1631
    %v1664 = vpop.permute.xlu0 %1663
    %1667 = vset.pattern.permute.xlu0 0
    %1668 = vperm.xlu0 %1667, %v1633
    %v1669 = vpop.permute.xlu0 %1668
    %1672 = vset.pattern.permute.xlu0 0
    %1673 = vperm.xlu0 %1672, %v1635
    %v1674 = vpop.permute.xlu0 %1673
    %v1676 = vmul.f32 %v1574, %v1639
    %v1677 = vmul.f32 %v1579, %v1644
    %v1678 = vmul.f32 %v1584, %v1649
    %v1679 = vmul.f32 %v1589, %v1654
    %v1680 = vmul.f32 %v1594, %v1659
    %v1681 = vmul.f32 %v1599, %v1664
    %v1682 = vmul.f32 %v1604, %v1669
    %v1683 = vmul.f32 %v1609, %v1674
    %1684 = vst [vmem:[#allocation11] sm:$0xff] %v1676
    %1685 = vst [vmem:[#allocation11 + $0x8] sm:$0xff] %v1677
    %1686 = vst [vmem:[#allocation11 + $0x10] sm:$0xff] %v1678
    %1687 = vst [vmem:[#allocation11 + $0x18] sm:$0xff] %v1679
    %1688 = vst [vmem:[#allocation11 + $0x20] sm:$0xff] %v1680
    %1689 = vst [vmem:[#allocation11 + $0x28] sm:$0xff] %v1681
    %1690 = vst [vmem:[#allocation11 + $0x30] sm:$0xff] %v1682
    %1691 = vst [vmem:[#allocation11 + $0x38] sm:$0xff] %v1683
    // Predicated region
    $region54: #{tpu_custom_call.1} parent=1 // pred_check
      _
    $region55: #{tpu_custom_call.1} parent=1 // pred_check_branch
      %1693 = sbr.rel (0) target = $region57
    $region56: #{tpu_custom_call.1} parent=1 // pred_region
      %s1695 = ssub.s32 1024, 1024
      %1696 = vsyncadd [#allocation4], %s1695
      %s1697 = sshll.u32 [#allocation11], 4
      %s1698 = int_to_ptr.vmem [resolvable:$true] %s1697
      %1703 = dma.vmem_to_hbm [thread:$0]  %s1698, 1024, %s8, [#allocation4], 128, 128, 8
    $region57: #{tpu_custom_call.1} parent=1 // pred_fallthru
      _
    // Predicated region
    $region58: #{tpu_custom_call.1} parent=1 // pred_check
      _
    $region59: #{tpu_custom_call.1} parent=1 // pred_check_branch
      %1705 = sbr.rel (0) target = $region61
    $region60: #{tpu_custom_call.1} parent=1 // pred_region
      %1706 = dma.done [#allocation4], 1024
    $region61: #{tpu_custom_call.1} parent=1 // pred_fallthru
      _
    %1707 = vsyncpa [#allocation3], 1
    %1708 = vsyncpa [#allocation6], 1
    %1709 = vsyncpa [#allocation9], 1
    %1710 = vsyncpa [#allocation4], 1

</llo_original>
